<compile_context>
chip_gen: v7x
topology: tpu7x:2x2x1
jax: 0.10.0
libtpu: 0.0.40
codegen_flags: <defaults>
</compile_context>

<pallas_src>
import functools

import numpy as np
import jax
import jax.numpy as jnp
from jax.experimental import pallas as pl
from jax.experimental.pallas import tpu as pltpu


# ----------------------------- Pallas kernel --------------------------------
def memnn_hops_kernel(q_ref, mem_ref, mask_ref, wt_ref, o_ref, *, hops):
    q = q_ref[...]                       # [Bt, E] f32
    mem = mem_ref[...]                   # [Bt, M, E] f32 (in_memory == out_memory)
    valid = mask_ref[...] > 0.0          # [Bt, M] bool (computed once)
    w_t = wt_ref[...]                    # [E, E] (already transposed)

    neg_inf = jnp.float32(-1e20)
    for h in range(hops):
        # attention = bmm(in_mem, q[:, :, None]).squeeze(2) -> [Bt, M]
        # (batched MXU contraction; flash-attention 'bqd,bkd->bqk' pattern)
        s = jnp.einsum("bqe,bme->bqm", q[:, None, :], mem,
                       preferred_element_type=jnp.float32)       # [Bt, 1, M]
        attn = s[:, 0, :]                                         # [Bt, M]
        # masked softmax over memory slots (torch softmax dim=1 on 2-D tensor)
        attn = jnp.where(valid, attn, neg_inf)
        attn = attn - jnp.max(attn, axis=1, keepdims=True)
        e = jnp.exp(attn)
        denom = jnp.sum(e, axis=1, keepdims=True)
        # approx reciprocal (free EUP slot) on intermediate hops, exact on last
        inv = pl.reciprocal(denom, approx=(h + 1 < hops))
        probs = e * inv                                           # [Bt, M]
        # memory_output = bmm(probs[:, None, :], out_mem).squeeze(1) -> [Bt, E]
        mo = jnp.einsum("bqm,bme->bqe", probs[:, None, :], mem,
                        preferred_element_type=jnp.float32)       # [Bt, 1, E]
        # linear (no bias): q @ W.T, plus residual memory read
        q = mo[:, 0, :] + jnp.dot(q, w_t, preferred_element_type=jnp.float32)

    o_ref[...] = q


# ----------------------------- tiling selection ------------------------------
def _round_up(x, m):
    return ((x + m - 1) // m) * m


def choose_tiling(B, M, E, *, target_b_tile=256):
    """Pick (b_tile, B_pad, vmem_limit_bytes) per hardware generation.

    - targets 256 batch rows / grid step (fills the v6e/v7x MXU M dim; two
      passes of the 128x128 v5e MXU),
    - respects a VMEM budget derived from the chip's capacity (v7x = 64 MiB),
    - guarantees >= 2 grid steps so both v7x TensorCores get work.
    """
    try:
        cap = int(pltpu.get_tpu_info().vmem_capacity_bytes)
    except Exception:
        cap = 64 << 20                       # assume the smallest (v7x)
    budget = min(max(cap // 2, 16 << 20), 48 << 20)

    def step_bytes(bt):
        # double-buffered mem + q + out + mask tiles, plus the resident weight
        per_tile = bt * M * E + 2 * bt * E + bt * M
        return 4 * (2 * per_tile + 2 * E * E)

    bt = max(8, min(_round_up(target_b_tile, 8), _round_up(B, 8)))
    while bt > 8 and step_bytes(bt) > budget:
        bt = max(8, _round_up(bt // 2, 8))

    B_pad = _round_up(B, bt)
    if B_pad // bt < 2:                      # ensure >= 2 grid steps (v7x)
        if bt > 8:
            bt = max(8, _round_up(bt // 2, 8))
            B_pad = _round_up(B, bt)
        if B_pad // bt < 2:
            B_pad = 2 * bt

    return bt, B_pad, int(budget)


# ------------------------------- wrapper --------------------------------------
def memnn_hops(q, mem, mask, w_t, *, hops, b_tile, vmem_limit_bytes=None):
    """Multi-hop memory attention.

    q:[B_pad,E], mem:[B_pad,M,E], mask:[B_pad,M], w_t:[E,E] (pre-transposed).
    Inputs must already be batch-padded to a multiple of b_tile (done by the
    embedding producer, so there are no padding copies in the hot path).
    Note: the query buffer is donated (aliased onto the output).
    """
    q = jnp.asarray(q, jnp.float32)
    mem = jnp.asarray(mem, jnp.float32)
    mask = jnp.asarray(mask, jnp.float32)
    w_t = jnp.asarray(w_t, jnp.float32)

    B_pad, E = q.shape
    M = mem.shape[1]
    assert b_tile % 8 == 0 and B_pad % b_tile == 0

    if vmem_limit_bytes is None:
        vmem_limit_bytes = 32 << 20

    grid = (B_pad // b_tile,)
    return pl.pallas_call(
        functools.partial(memnn_hops_kernel, hops=hops),
        out_shape=jax.ShapeDtypeStruct((B_pad, E), jnp.float32),
        grid=grid,
        in_specs=[
            pl.BlockSpec((b_tile, E), lambda i: (i, 0)),
            pl.BlockSpec((b_tile, M, E), lambda i: (i, 0, 0)),
            pl.BlockSpec((b_tile, M), lambda i: (i, 0)),
            # weight: constant block index across the batch grid -> no re-DMA
            pl.BlockSpec((E, E), lambda i: (0, 0)),
        ],
        out_specs=pl.BlockSpec((b_tile, E), lambda i: (i, 0)),
        input_output_aliases={0: 0},          # output overwrites the query buf
        compiler_params=pltpu.CompilerParams(
            dimension_semantics=("parallel",),
            vmem_limit_bytes=int(vmem_limit_bytes)),
    )(q, mem, mask, w_t)


# --------------------------- Embedding glue (numpy) ---------------------------
# Reproduces Embed.forward with position_encoding=False, padding_idx=0:
# per (row, slot) -> mean of token embeddings (sum / length), zeros if empty.
# Emits batch-padded arrays directly so the kernel wrapper never copies.
# TODO(synk): ragged embedding-bag gather left in host glue (data-dependent
# offsets); a Pallas version would need scalar-prefetch offset tables.
def embed_bag_2d(table_np, lengths_np, flat_indices_np, batch_pad=None):
    R, C = lengths_np.shape
    E = table_np.shape[1]
    out = np.zeros((batch_pad or R, C, E), np.float32)
    offset = 0
    for i in range(R):
        for j in range(C):
            L = int(lengths_np[i, j])
            if L > 0:
                toks = flat_indices_np[offset:offset + L]
                out[i, j] = table_np[toks].sum(axis=0) / L
            offset += L
    return out


def embed_bag_1d(table_np, lengths_np, flat_indices_np, batch_pad=None):
    # lengths 1-D [B] -> treated as [1, B] inside Embed.forward, then squeezed
    B = lengths_np.shape[0]
    emb = embed_bag_2d(table_np, lengths_np[None, :], flat_indices_np)   # [1,B,E]
    out = np.zeros((batch_pad or B, table_np.shape[1]), np.float32)
    out[:B] = emb[0]
    return out


# --------------------------------- main ---------------------------------------
if __name__ == "__main__":
    # opt
    B = 2            # batch
    MEM_SIZE = 8     # opt['mem_size']
    E = 32           # opt['embedding_size']
    VOCAB = 50       # len(dictionary)
    HOPS = 2         # opt['hops']

    key = jax.random.PRNGKey(0)
    k_emb, k_lin, k_mlen, k_mtok, k_qlen, k_qtok = jax.random.split(key, 6)

    # Parameters (deterministic init).  W^T built ONCE at init.
    emb_table = 0.1 * jax.random.normal(k_emb, (VOCAB, E), jnp.float32)
    emb_table = emb_table.at[0].set(0.0)                         # padding_idx=0
    hop_w = np.asarray(0.1 * jax.random.normal(k_lin, (E, E), jnp.float32))  # [out,in]
    hop_w_t = np.ascontiguousarray(hop_w.T)                      # pre-transposed

    # Synthetic token data.
    memory_lengths = np.asarray(
        jax.random.randint(k_mlen, (B, MEM_SIZE), 0, 5), np.int64)
    memories = np.asarray(
        jax.random.randint(k_mtok, (int(memory_lengths.sum()),), 1, VOCAB),
        np.int64)
    query_lengths = np.asarray(
        jax.random.randint(k_qlen, (B,), 1, 6), np.int64)
    queries = np.asarray(
        jax.random.randint(k_qtok, (int(query_lengths.sum()),), 1, VOCAB),
        np.int64)

    # Tile sizing (per-generation VMEM budget, >= 2 grid steps).
    b_tile, B_pad, vmem_limit = choose_tiling(B, MEM_SIZE, E)

    # Embeddings. single_embedder=True -> in_memory == out_memory: embed ONCE,
    # directly at the padded batch size (padded rows are zero / masked out).
    table_np = np.asarray(emb_table)
    mem_emb = embed_bag_2d(table_np, memory_lengths, memories, batch_pad=B_pad)  # [B_pad,M,E]
    q_emb = embed_bag_1d(table_np, query_lengths, queries, batch_pad=B_pad)      # [B_pad,E]
    attn_mask = np.zeros((B_pad, MEM_SIZE), np.float32)
    attn_mask[:B] = (memory_lengths != 0).astype(np.float32)                     # [B_pad,M]

    # Pallas multi-hop memory attention.
    out = memnn_hops(q_emb, mem_emb, attn_mask, hop_w_t,
                     hops=HOPS, b_tile=b_tile, vmem_limit_bytes=vmem_limit)
    out = np.asarray(jax.block_until_ready(out))[:B]

    # Pure-numpy reference of Hop.forward repeated HOPS times (torch semantics).
    q_ref = q_emb[:B].copy()
    mm, mk, w = mem_emb[:B], attn_mask[:B], hop_w
    for _ in range(HOPS):
        a = np.einsum("bme,be->bm", mm, q_ref)
        a = mk * a + (1.0 - mk) * (-1e20)
        a = a - a.max(axis=1, keepdims=True)
        p = np.exp(a)
        p = p / p.sum(axis=1, keepdims=True)
        q_ref = np.einsum("bm,bme->be", p, mm) + q_ref @ w.T

    # Tolerance loosened slightly for the EUP approximate reciprocal (hop 0).
    np.testing.assert_allclose(out, q_ref, rtol=2e-3, atol=2e-3)
    print("KERNEL_OK")
</pallas_src>

<mosaic_0001>
module attributes {stable_mosaic.version = 11 : i64} {
  func.func @memnn_hops_kernel(%arg0: i32, %arg1: memref<8x32xf32, #tpu.memory_space<vmem>>, %arg2: memref<8x8x32xf32, #tpu.memory_space<vmem>>, %arg3: memref<8x8xf32, #tpu.memory_space<vmem>>, %arg4: memref<32x32xf32, #tpu.memory_space<vmem>>, %arg5: memref<8x32xf32, #tpu.memory_space<vmem>>) attributes {dimension_semantics = [#tpu.dimension_semantics<parallel>], iteration_bounds = array<i64: 2>, scalar_prefetch = 0 : i64, scratch_operands = 0 : i64, tpu.core_type = #tpu.core_type<tc>, window_params = [{transform_indices = @transform_0, window_bounds = array<i64: 8, 32>}, {transform_indices = @transform_1, window_bounds = array<i64: 8, 8, 32>}, {transform_indices = @transform_2, window_bounds = array<i64: 8, 8>}, {pipeline_mode = #tpu.pipeline_mode<synchronous>, transform_indices = @transform_3, window_bounds = array<i64: 32, 32>}, {transform_indices = @transform_4, window_bounds = array<i64: 8, 32>}]} {
    %c0 = arith.constant 0 : index
    %c0_0 = arith.constant 0 : index
    %0 = vector.load %arg1[%c0, %c0_0] : memref<8x32xf32, #tpu.memory_space<vmem>>, vector<8x32xf32>
    %c0_1 = arith.constant 0 : index
    %c0_2 = arith.constant 0 : index
    %c0_3 = arith.constant 0 : index
    %1 = vector.load %arg2[%c0_1, %c0_2, %c0_3] : memref<8x8x32xf32, #tpu.memory_space<vmem>>, vector<8x8x32xf32>
    %c0_4 = arith.constant 0 : index
    %c0_5 = arith.constant 0 : index
    %2 = vector.load %arg3[%c0_4, %c0_5] : memref<8x8xf32, #tpu.memory_space<vmem>>, vector<8x8xf32>
    %cst = arith.constant 0.000000e+00 : f32
    %3 = vector.broadcast %cst : f32 to vector<8x8xf32>
    %4 = arith.cmpf ogt, %2, %3 : vector<8x8xf32>
    %c0_6 = arith.constant 0 : index
    %c0_7 = arith.constant 0 : index
    %5 = vector.load %arg4[%c0_6, %c0_7] : memref<32x32xf32, #tpu.memory_space<vmem>>, vector<32x32xf32>
    %6 = vector.shape_cast %0 : vector<8x32xf32> to vector<8x1x32xf32>
    "tpu.trace_start"() <{level = 10 : i32, message = "bqe,bme->bqm"}> : () -> ()
    %cst_8 = arith.constant dense<0.000000e+00> : vector<8x1x8xf32>
    %7 = tpu.matmul %6, %1, %cst_8 {dimension_numbers = #tpu.dot_dimension_numbers<[2], [2], [1], [1], [0, 0, 0, 1, 1, 1], [0], [0]>} : vector<8x1x32xf32>, vector<8x8x32xf32>, vector<8x1x8xf32> -> vector<8x1x8xf32>
    "tpu.trace_stop"() : () -> ()
    %8 = vector.shape_cast %7 : vector<8x1x8xf32> to vector<8x8xf32>
    %cst_9 = arith.constant -1.000000e+20 : f32
    %9 = vector.broadcast %cst_9 : f32 to vector<8x8xf32>
    %10 = arith.select %4, %8, %9 : vector<8x8xi1>, vector<8x8xf32>
    %cst_10 = arith.constant dense<0xFF800000> : vector<8xf32>
    %11 = vector.multi_reduction <maximumf>, %10, %cst_10 [1] : vector<8x8xf32> to vector<8xf32>
    %12 = vector.shape_cast %11 : vector<8xf32> to vector<8x1xf32>
    %13 = vector.broadcast %12 : vector<8x1xf32> to vector<8x8xf32>
    %14 = arith.subf %10, %13 : vector<8x8xf32>
    %15 = math.exp %14 : vector<8x8xf32>
    %cst_11 = arith.constant dense<0.000000e+00> : vector<8xf32>
    %16 = vector.multi_reduction <add>, %15, %cst_11 [1] : vector<8x8xf32> to vector<8xf32>
    %17 = vector.shape_cast %16 : vector<8xf32> to vector<8x1xf32>
    %18 = tpu.reciprocal %17 {approx = true} : vector<8x1xf32> -> vector<8x1xf32>
    %19 = vector.broadcast %18 : vector<8x1xf32> to vector<8x8xf32>
    %20 = arith.mulf %15, %19 : vector<8x8xf32>
    %21 = vector.shape_cast %20 : vector<8x8xf32> to vector<8x1x8xf32>
    "tpu.trace_start"() <{level = 10 : i32, message = "bqm,bme->bqe"}> : () -> ()
    %cst_12 = arith.constant dense<0.000000e+00> : vector<8x1x32xf32>
    %22 = tpu.matmul %21, %1, %cst_12 {dimension_numbers = #tpu.dot_dimension_numbers<[2], [1], [1], [2], [0, 0, 0, 1, 1, 2], [0], [0]>} : vector<8x1x8xf32>, vector<8x8x32xf32>, vector<8x1x32xf32> -> vector<8x1x32xf32>
    "tpu.trace_stop"() : () -> ()
    %23 = vector.shape_cast %22 : vector<8x1x32xf32> to vector<8x32xf32>
    %cst_13 = arith.constant dense<0.000000e+00> : vector<8x32xf32>
    %24 = tpu.matmul %0, %5, %cst_13 {dimension_numbers = #tpu.dot_dimension_numbers<[1], [0], [0], [1], [0, 0, 1, 1], [], []>} : vector<8x32xf32>, vector<32x32xf32>, vector<8x32xf32> -> vector<8x32xf32>
    %25 = arith.addf %23, %24 : vector<8x32xf32>
    %26 = vector.shape_cast %25 : vector<8x32xf32> to vector<8x1x32xf32>
    "tpu.trace_start"() <{level = 10 : i32, message = "bqe,bme->bqm"}> : () -> ()
    %cst_14 = arith.constant dense<0.000000e+00> : vector<8x1x8xf32>
    %27 = tpu.matmul %26, %1, %cst_14 {dimension_numbers = #tpu.dot_dimension_numbers<[2], [2], [1], [1], [0, 0, 0, 1, 1, 1], [0], [0]>} : vector<8x1x32xf32>, vector<8x8x32xf32>, vector<8x1x8xf32> -> vector<8x1x8xf32>
    "tpu.trace_stop"() : () -> ()
    %28 = vector.shape_cast %27 : vector<8x1x8xf32> to vector<8x8xf32>
    %cst_15 = arith.constant -1.000000e+20 : f32
    %29 = vector.broadcast %cst_15 : f32 to vector<8x8xf32>
    %30 = arith.select %4, %28, %29 : vector<8x8xi1>, vector<8x8xf32>
    %cst_16 = arith.constant dense<0xFF800000> : vector<8xf32>
    %31 = vector.multi_reduction <maximumf>, %30, %cst_16 [1] : vector<8x8xf32> to vector<8xf32>
    %32 = vector.shape_cast %31 : vector<8xf32> to vector<8x1xf32>
    %33 = vector.broadcast %32 : vector<8x1xf32> to vector<8x8xf32>
    %34 = arith.subf %30, %33 : vector<8x8xf32>
    %35 = math.exp %34 : vector<8x8xf32>
    %cst_17 = arith.constant dense<0.000000e+00> : vector<8xf32>
    %36 = vector.multi_reduction <add>, %35, %cst_17 [1] : vector<8x8xf32> to vector<8xf32>
    %37 = vector.shape_cast %36 : vector<8xf32> to vector<8x1xf32>
    %38 = tpu.reciprocal %37 : vector<8x1xf32> -> vector<8x1xf32>
    %39 = vector.broadcast %38 : vector<8x1xf32> to vector<8x8xf32>
    %40 = arith.mulf %35, %39 : vector<8x8xf32>
    %41 = vector.shape_cast %40 : vector<8x8xf32> to vector<8x1x8xf32>
    "tpu.trace_start"() <{level = 10 : i32, message = "bqm,bme->bqe"}> : () -> ()
    %cst_18 = arith.constant dense<0.000000e+00> : vector<8x1x32xf32>
    %42 = tpu.matmul %41, %1, %cst_18 {dimension_numbers = #tpu.dot_dimension_numbers<[2], [1], [1], [2], [0, 0, 0, 1, 1, 2], [0], [0]>} : vector<8x1x8xf32>, vector<8x8x32xf32>, vector<8x1x32xf32> -> vector<8x1x32xf32>
    "tpu.trace_stop"() : () -> ()
    %43 = vector.shape_cast %42 : vector<8x1x32xf32> to vector<8x32xf32>
    %cst_19 = arith.constant dense<0.000000e+00> : vector<8x32xf32>
    %44 = tpu.matmul %25, %5, %cst_19 {dimension_numbers = #tpu.dot_dimension_numbers<[1], [0], [0], [1], [0, 0, 1, 1], [], []>} : vector<8x32xf32>, vector<32x32xf32>, vector<8x32xf32> -> vector<8x32xf32>
    %45 = arith.addf %43, %44 : vector<8x32xf32>
    %c0_20 = arith.constant 0 : index
    %c0_21 = arith.constant 0 : index
    %46 = vector.load %arg5[%c0_20, %c0_21] : memref<8x32xf32, #tpu.memory_space<vmem>>, vector<8x32xf32>
    tpu.vector_store %arg5[%c0_20, %c0_21], %45 {strides = array<i32>} : memref<8x32xf32, #tpu.memory_space<vmem>>, vector<8x32xf32>,
    return
  }
  func.func @transform_0(%arg0: i32) -> (i32, i32) {
    %c0_i32 = arith.constant 0 : i32
    %c0_i32_0 = arith.constant 0 : i32
    return %arg0, %c0_i32 : i32, i32
  }
  func.func @transform_1(%arg0: i32) -> (i32, i32, i32) {
    %c0_i32 = arith.constant 0 : i32
    %c0_i32_0 = arith.constant 0 : i32
    %c0_i32_1 = arith.constant 0 : i32
    return %arg0, %c0_i32, %c0_i32_0 : i32, i32, i32
  }
  func.func @transform_2(%arg0: i32) -> (i32, i32) {
    %c0_i32 = arith.constant 0 : i32
    %c0_i32_0 = arith.constant 0 : i32
    return %arg0, %c0_i32 : i32, i32
  }
  func.func @transform_3(%arg0: i32) -> (i32, i32) {
    %c0_i32 = arith.constant 0 : i32
    %c0_i32_0 = arith.constant 0 : i32
    %c0_i32_1 = arith.constant 0 : i32
    return %c0_i32, %c0_i32_0 : i32, i32
  }
  func.func @transform_4(%arg0: i32) -> (i32, i32) {
    %c0_i32 = arith.constant 0 : i32
    %c0_i32_0 = arith.constant 0 : i32
    return %arg0, %c0_i32 : i32, i32
  }
}

</mosaic_0001>

<llo_original>
// kernel: tpu_custom_call.1
$region0: #{tpu_custom_call.1}
  #allocation0 [shape = 'u32[]', space=smem, size = 0x4, offset = 0x4, fixed_abs, tag = 'smem constant byte address 0x4 - core index']
  #allocation1 [shape = 'u32[144,128]{1,0:T(1,128)}', space=vmem, size = 0x12000, scoped, tag = 'internal scratch']
  %s0 = inlined_call_operand.hbm [shape: f32[16,32], index: 0, kind: input, shape index: {}, may-alias: {0,4}]
  %s1 = inlined_call_operand.hbm [shape: f32[16,8,32], index: 1, kind: input, shape index: {}]
  %s2 = inlined_call_operand.vmem [shape: f32[16,8], index: 2, kind: input, shape index: {}]
  %s3 = inlined_call_operand.vmem [shape: f32[32,32], index: 3, kind: input, shape index: {}]
  %s4 = inlined_call_operand.hbm [shape: f32[16,32], index: 4, kind: output, shape index: {}, may-alias: {0,4}]
  %s5 = sld [smem:[#allocation0]]
  $region57: #{tpu_custom_call.1} parent=0
    _
  %s7 = ssub.s32 1, %s5
  %s8 = scalar_select 0, %s7, %s5
  $region1: #{tpu_custom_call.1} parent=0
    #allocation2 [shape = 'u8[8192]{0}', space=vmem, size = 0x2000, scoped, tag = 'input window, operand 0']
    #allocation3 [shape = 's32[2]{0}', space=sflag, size = 0x8, scoped, tag = 'scoped memory for tpu_custom_call.1']
    #allocation4 [shape = 's32[2]{0}', space=sflag, size = 0x8, scoped, tag = 'scoped memory for tpu_custom_call.1']
    #allocation5 [shape = 'u8[65536]{0}', space=vmem, size = 0x10000, scoped, tag = 'input window, operand 1']
    #allocation6 [shape = 's32[2]{0}', space=sflag, size = 0x8, scoped, tag = 'scoped memory for tpu_custom_call.1']
    #allocation7 [shape = 'u8[8192]{0}', space=vmem, size = 0x2000, scoped, tag = 'output window, operand 0']
    %9 = vsyncpa [#allocation3], 0
    %s10 = scalar_lea.sflag [#allocation3], 1
    %11 = vsyncpa %s10, 0
    %12 = vsyncpa [#allocation6], 0
    %s13 = scalar_lea.sflag [#allocation6], 1
    %14 = vsyncpa %s13, 0
    %15 = vsyncpa [#allocation4], 0
    %s16 = scalar_lea.sflag [#allocation4], 1
    %17 = vsyncpa %s16, 0
    loop: start=0, step=1, limit=4
    $region2: #{tpu_custom_call.1} parent=1 // loop_pre_header
      _
    $region3: #{tpu_custom_call.1} parent=1 // loop_header
      %s19 = sphi 0, %s23
      %p20 = scmp.ge.s32.totalorder %s19, 4
      %s29 = sphi 0, %s31
      %s32 = sphi 0, %s29
      %s33 = sphi 0, %s32
      %s49 = sphi 0, %s33
      %s55 = sphi 0, %s57
      %s58 = sphi 0, %s55
      %s59 = sphi 0, %s58
      %s75 = sphi 0, %s59
      %s81 = sphi 0, %s83
      %s84 = sphi 0, %s81
      %s85 = sphi 0, %s84
      %s101 = sphi 0, %s85
      %s105 = sphi 0, %s105
      %s107 = sphi 0, %s105
      %s108 = sphi 0, %s107
      %s122 = sphi 0, %s108
      %s128 = sphi 0, %s130
      %s131 = sphi 0, %s128
      %s132 = sphi 0, %s131
      %s148 = sphi 0, %s132
    $region4: #{tpu_custom_call.1} parent=1 // loop_header_branch
      %22 = sbr.rel (%p20) target = $region8
    $region5: #{tpu_custom_call.1} parent=1 // loop_body
      %s24 = ssub.s32 %s19, 1
      %s25 = ssub.s32 %s19, 2
      %s26 = sadd.s32 %s19, 1
      %s27 = ssub.s32 %s19, %s26
      %p28 = scmp.eq.s32.totalorder %s27, 0
      %s30 = sadd.s32 %s29, 1
      %s31 = scalar_select %p28, %s29, %s30
      %p34 = pneg %p28
      %p35 = scmp.eq.s32.totalorder %s19, 1
      %p36 = por %p34, %p35
      %p37 = scmp.ne.s32.totalorder %s29, %s32
      %p38 = scmp.eq.s32.totalorder %s19, 0
      %p39 = por %p37, %p38
      %p40 = scmp.ne.s32.totalorder %s29, %s32
      %p41 = scmp.eq.s32.totalorder %s24, 1
      %p42 = por %p40, %p41
      %p43 = scmp.ne.s32.totalorder %s32, %s33
      %p44 = scmp.eq.s32.totalorder %s24, 0
      %p45 = por %p43, %p44
      %p46 = scmp.ne.s32.totalorder %s32, %s33
      %p47 = scmp.eq.s32.totalorder %s25, 1
      %p48 = por %p46, %p47
      %p50 = scmp.ne.s32.totalorder %s33, %s49
      %p51 = scmp.eq.s32.totalorder %s25, 0
      %p52 = por %p50, %p51
      %s53 = ssub.s32 %s19, %s26
      %p54 = scmp.eq.s32.totalorder %s53, 0
      %s56 = sadd.s32 %s55, 1
      %s57 = scalar_select %p54, %s55, %s56
      %p60 = pneg %p54
      %p61 = scmp.eq.s32.totalorder %s19, 1
      %p62 = por %p60, %p61
      %p63 = scmp.ne.s32.totalorder %s55, %s58
      %p64 = scmp.eq.s32.totalorder %s19, 0
      %p65 = por %p63, %p64
      %p66 = scmp.ne.s32.totalorder %s55, %s58
      %p67 = scmp.eq.s32.totalorder %s24, 1
      %p68 = por %p66, %p67
      %p69 = scmp.ne.s32.totalorder %s58, %s59
      %p70 = scmp.eq.s32.totalorder %s24, 0
      %p71 = por %p69, %p70
      %p72 = scmp.ne.s32.totalorder %s58, %s59
      %p73 = scmp.eq.s32.totalorder %s25, 1
      %p74 = por %p72, %p73
      %p76 = scmp.ne.s32.totalorder %s59, %s75
      %p77 = scmp.eq.s32.totalorder %s25, 0
      %p78 = por %p76, %p77
      %s79 = ssub.s32 %s19, %s26
      %p80 = scmp.eq.s32.totalorder %s79, 0
      %s82 = sadd.s32 %s81, 1
      %s83 = scalar_select %p80, %s81, %s82
      %p86 = pneg %p80
      %p87 = scmp.eq.s32.totalorder %s19, 1
      %p88 = por %p86, %p87
      %p89 = scmp.ne.s32.totalorder %s81, %s84
      %p90 = scmp.eq.s32.totalorder %s19, 0
      %p91 = por %p89, %p90
      %p92 = scmp.ne.s32.totalorder %s81, %s84
      %p93 = scmp.eq.s32.totalorder %s24, 1
      %p94 = por %p92, %p93
      %p95 = scmp.ne.s32.totalorder %s84, %s85
      %p96 = scmp.eq.s32.totalorder %s24, 0
      %p97 = por %p95, %p96
      %p98 = scmp.ne.s32.totalorder %s84, %s85
      %p99 = scmp.eq.s32.totalorder %s25, 1
      %p100 = por %p98, %p99
      %p102 = scmp.ne.s32.totalorder %s85, %s101
      %p103 = scmp.eq.s32.totalorder %s25, 0
      %p104 = por %p102, %p103
      %s106 = sadd.s32 %s105, 1
      %p109 = scmp.eq.s32.totalorder %s19, 1
      %p110 = scmp.ne.s32.totalorder %s105, %s107
      %p111 = scmp.eq.s32.totalorder %s19, 0
      %p112 = por %p110, %p111
      %p113 = scmp.ne.s32.totalorder %s105, %s107
      %p114 = scmp.eq.s32.totalorder %s24, 1
      %p115 = por %p113, %p114
      %p116 = scmp.ne.s32.totalorder %s107, %s108
      %p117 = scmp.eq.s32.totalorder %s24, 0
      %p118 = por %p116, %p117
      %p119 = scmp.ne.s32.totalorder %s107, %s108
      %p120 = scmp.eq.s32.totalorder %s25, 1
      %p121 = por %p119, %p120
      %p123 = scmp.ne.s32.totalorder %s108, %s122
      %p124 = scmp.eq.s32.totalorder %s25, 0
      %p125 = por %p123, %p124
      %s126 = ssub.s32 %s19, %s26
      %p127 = scmp.eq.s32.totalorder %s126, 0
      %s129 = sadd.s32 %s128, 1
      %s130 = scalar_select %p127, %s128, %s129
      %p133 = pneg %p127
      %p134 = scmp.eq.s32.totalorder %s19, 1
      %p135 = por %p133, %p134
      %p136 = scmp.ne.s32.totalorder %s128, %s131
      %p137 = scmp.eq.s32.totalorder %s19, 0
      %p138 = por %p136, %p137
      %p139 = scmp.ne.s32.totalorder %s128, %s131
      %p140 = scmp.eq.s32.totalorder %s24, 1
      %p141 = por %p139, %p140
      %p142 = scmp.ne.s32.totalorder %s131, %s132
      %p143 = scmp.eq.s32.totalorder %s24, 0
      %p144 = por %p142, %p143
      %p145 = scmp.ne.s32.totalorder %s131, %s132
      %p146 = scmp.eq.s32.totalorder %s25, 1
      %p147 = por %p145, %p146
      %p149 = scmp.ne.s32.totalorder %s132, %s148
      %p150 = scmp.eq.s32.totalorder %s25, 0
      %p151 = por %p149, %p150
      %p152 = scmp.le.s32.totalorder 1, %s19
      %p153 = scmp.lt.s32.totalorder %s19, 3
      %p154 = pnand %p152, %p153
      %p155 = pneg %p154
      // Predicated region
      $region9: #{tpu_custom_call.1} parent=5 // pred_check
        _
      $region10: #{tpu_custom_call.1} parent=5 // pred_check_branch
        %157 = sbr.rel (%p154) target = $region12
      $region11: #{tpu_custom_call.1} parent=5 // pred_region
        %s158 = ssub.s32 %s19, 1
        // Predicated region
        $region13: #{tpu_custom_call.1} parent=11 // pred_check
          %p159 = pneg %p118
        $region14: #{tpu_custom_call.1} parent=11 // pred_check_branch
          %161 = sbr.rel (%p159) target = $region16
        $region15: #{tpu_custom_call.1} parent=11 // pred_region
          _
        $region16: #{tpu_custom_call.1} parent=11 // pred_fallthru
          _
      $region12: #{tpu_custom_call.1} parent=5 // pred_fallthru
        _
      %p162 = scmp.lt.s32.totalorder %s19, 2
      // Predicated region
      $region17: #{tpu_custom_call.1} parent=5 // pred_check
        %p163 = pneg %p162
      $region18: #{tpu_custom_call.1} parent=5 // pred_check_branch
        %165 = sbr.rel (%p163) target = $region20
      $region19: #{tpu_custom_call.1} parent=5 // pred_region
        // Predicated region
        $region21: #{tpu_custom_call.1} parent=19 // pred_check
          %p166 = pneg %p39
        $region22: #{tpu_custom_call.1} parent=19 // pred_check_branch
          %168 = sbr.rel (%p166) target = $region24
        $region23: #{tpu_custom_call.1} parent=19 // pred_region
          %s169 = sand.u32 %s29, 1
          %s170 = scalar_lea.sflag [#allocation3], %s169
          %s171 = sand.u32 %s29, 1
          %s172 = smul.addr %s171, 8
          %s173 = scalar_lea.vmem [#allocation2], %s172
          %s175 = ssub.s32 128, 128
          %176 = vsyncadd %s170, %s175
          %s177 = smul.addr %s19, 128
          %s178 = scalar_lea.hbm %s0, %s177
          %s180 = sshll.u32 %s173, 4
          %s181 = int_to_ptr.vmem [resolvable:$true] %s180
          %183 = dma.hbm_to_vmem [thread:$0]  %s178, 128, %s181, %s170
        $region24: #{tpu_custom_call.1} parent=19 // pred_fallthru
          _
        // Predicated region
        $region25: #{tpu_custom_call.1} parent=19 // pred_check
          %p184 = pneg %p65
        $region26: #{tpu_custom_call.1} parent=19 // pred_check_branch
          %186 = sbr.rel (%p184) target = $region28
        $region27: #{tpu_custom_call.1} parent=19 // pred_region
          %s187 = sand.u32 %s55, 1
          %s188 = scalar_lea.sflag [#allocation6], %s187
          %s189 = sand.u32 %s55, 1
          %s190 = smul.addr %s189, 64
          %s191 = scalar_lea.vmem [#allocation5], %s190
          %s192 = smul.u32 8, %s19
          %s194 = ssub.s32 1024, 1024
          %195 = vsyncadd %s188, %s194
          %s196 = smul.addr %s192, 128
          %s197 = scalar_lea.hbm %s1, %s196
          %s198 = sshll.u32 %s191, 4
          %s199 = int_to_ptr.vmem [resolvable:$true] %s198
          %204 = dma.hbm_to_vmem [thread:$0]  %s197, 1024, %s199, %s188, 128, 128, 8
        $region28: #{tpu_custom_call.1} parent=19 // pred_fallthru
          _
        // Predicated region
        $region29: #{tpu_custom_call.1} parent=19 // pred_check
          %p205 = pneg %p91
        $region30: #{tpu_custom_call.1} parent=19 // pred_check_branch
          %207 = sbr.rel (%p205) target = $region32
        $region31: #{tpu_custom_call.1} parent=19 // pred_region
          %p208 = scmp.lt.s32.totalorder %s19, 1
          %s209 = scalar_select %p208, %s19, 1
          %s210 = smul.addr %s209, 8
          %s211 = scalar_lea.vmem %s2, %s210
        $region32: #{tpu_custom_call.1} parent=19 // pred_fallthru
          _
      $region20: #{tpu_custom_call.1} parent=5 // pred_fallthru
        _
      %p212 = scmp.le.s32.totalorder 1, %s19
      %p213 = scmp.lt.s32.totalorder %s19, 3
      %p214 = pnand %p212, %p213
      %p215 = pneg %p214
      // Predicated region
      $region33: #{tpu_custom_call.1} parent=5 // pred_check
        _
      $region34: #{tpu_custom_call.1} parent=5 // pred_check_branch
        %217 = sbr.rel (%p214) target = $region36
      $region35: #{tpu_custom_call.1} parent=5 // pred_region
        %s218 = ssub.s32 %s19, 1
        %s219 = sand.u32 %s32, 1
        %s220 = scalar_lea.sflag [#allocation3], %s219
        %s221 = sand.u32 %s32, 1
        %s222 = smul.addr %s221, 8
        %s223 = scalar_lea.vmem [#allocation2], %s222
        // Predicated region
        $region37: #{tpu_custom_call.1} parent=35 // pred_check
          %p224 = pneg %p45
        $region38: #{tpu_custom_call.1} parent=35 // pred_check_branch
          %226 = sbr.rel (%p224) target = $region40
        $region39: #{tpu_custom_call.1} parent=35 // pred_region
          %227 = dma.done %s220, 128
        $region40: #{tpu_custom_call.1} parent=35 // pred_fallthru
          _
        %s228 = sand.u32 %s58, 1
        %s229 = scalar_lea.sflag [#allocation6], %s228
        %s230 = sand.u32 %s58, 1
        %s231 = smul.addr %s230, 64
        %s232 = scalar_lea.vmem [#allocation5], %s231
        // Predicated region
        $region41: #{tpu_custom_call.1} parent=35 // pred_check
          %p233 = pneg %p71
        $region42: #{tpu_custom_call.1} parent=35 // pred_check_branch
          %235 = sbr.rel (%p233) target = $region44
        $region43: #{tpu_custom_call.1} parent=35 // pred_region
          %236 = dma.done %s229, 1024
        $region44: #{tpu_custom_call.1} parent=35 // pred_fallthru
          _
        %s237 = sand.u32 %s32, 1
        %s238 = scalar_lea.sflag [#allocation3], %s237
        %s239 = sand.u32 %s32, 1
        %s240 = smul.addr %s239, 8
        %s241 = scalar_lea.vmem [#allocation2], %s240
        %p242 = pneg %p45
        %p243 = pneg %p42
        %s244 = sand.u32 %s58, 1
        %s245 = scalar_lea.sflag [#allocation6], %s244
        %s246 = sand.u32 %s58, 1
        %s247 = smul.addr %s246, 64
        %s248 = scalar_lea.vmem [#allocation5], %s247
        %p249 = pneg %p71
        %p250 = pneg %p68
        %p251 = scmp.lt.s32.totalorder %s24, 1
        %s252 = scalar_select %p251, %s24, 1
        %s253 = smul.addr %s252, 8
        %s254 = scalar_lea.vmem %s2, %s253
        %p255 = pneg %p97
        %p256 = pneg %p94
        %p257 = pneg %p118
        %p258 = pneg %p115
        %p259 = pneg %p144
        %p260 = pneg %p141
        %s261 = sand.u32 %s131, 1
        %s262 = scalar_lea.sflag [#allocation4], %s261
        %s263 = sand.u32 %s131, 1
        %s264 = smul.addr %s263, 8
        %s265 = scalar_lea.vmem [#allocation7], %s264
        %s266 = smul.u32 8, %s24
        %p267 = scmp.lt.s32.totalorder %s24, 1
        %s268 = scalar_select %p267, %s24, 1
        %s269 = smul.addr %s268, 8
        %s270 = scalar_lea.vmem %s2, %s269
        %v271 = vld [vmem:[%s223] sm:$0xff]
        %v272 = vld [vmem:[%s232] sm:$0xff]
        %v273 = vld [vmem:[%s232 + $0x8] sm:$0xff]
        %v274 = vld [vmem:[%s232 + $0x10] sm:$0xff]
        %v275 = vld [vmem:[%s232 + $0x18] sm:$0xff]
        %v276 = vld [vmem:[%s232 + $0x20] sm:$0xff]
        %v277 = vld [vmem:[%s232 + $0x28] sm:$0xff]
        %v278 = vld [vmem:[%s232 + $0x30] sm:$0xff]
        %v279 = vld [vmem:[%s232 + $0x38] sm:$0xff]
        %v280 = vld [vmem:[%s270] sm:$0xff]
        %vm281 = vcmp.gt.f32.partialorder %v280, 0.0
        %v282 = vld [vmem:[%s3] sm:$0xff]
        %v283 = vld [vmem:[%s3 + $0x8] sm:$0xff]
        %v284 = vld [vmem:[%s3 + $0x10] sm:$0xff]
        %v285 = vld [vmem:[%s3 + $0x18] sm:$0xff]
        %v287 = vcombine.high %v271, %v271
        %v289 = vunpack.c.l.s4 1966171168
        %v290 = vunpack.c.0.s8 %v289
        %v291 = vlaneseq
        %v292 = vshrl.u32 %v291, 7
        %v293 = vsub.s32 %v290, %v292
        %v294 = vrot.slane %v271, %v293
        %v296 = vunpack.c.l.s4 1966171168
        %v297 = vunpack.c.0.s8 %v296
        %v298 = vlaneseq
        %v299 = vshrl.u32 %v298, 7
        %v300 = vsub.s32 %v297, %v299
        %v301 = vrot.slane %v287, %v300
        %v302 = vcombine.high %v294, %v294
        %v303 = vcombine.high %v301, %v301
        %v305 = vunpack.c.l.s4 1966171168
        %v306 = vunpack.c.0.s8 %v305
        %v307 = vlaneseq
        %v308 = vshrl.u32 %v307, 7
        %v309 = vsub.s32 %v306, %v308
        %v310 = vrot.slane %v294, %v309
        %v312 = vunpack.c.l.s4 1966171168
        %v313 = vunpack.c.0.s8 %v312
        %v314 = vlaneseq
        %v315 = vshrl.u32 %v314, 7
        %v316 = vsub.s32 %v313, %v315
        %v317 = vrot.slane %v301, %v316
        %v319 = vunpack.c.l.s4 1966171168
        %v320 = vunpack.c.0.s8 %v319
        %v321 = vlaneseq
        %v322 = vshrl.u32 %v321, 7
        %v323 = vsub.s32 %v320, %v322
        %v324 = vrot.slane %v302, %v323
        %v326 = vunpack.c.l.s4 1966171168
        %v327 = vunpack.c.0.s8 %v326
        %v328 = vlaneseq
        %v329 = vshrl.u32 %v328, 7
        %v330 = vsub.s32 %v327, %v329
        %v331 = vrot.slane %v303, %v330
        %v332 = vcombine.high %v310, %v310
        %v333 = vcombine.high %v317, %v317
        %v334 = vcombine.high %v324, %v324
        %v335 = vcombine.high %v331, %v331
        %vm336 = vcmask 261120
        %v337 = vsel %vm336, %v310, 0
        %v340 = vsel %vm336, %v272, 0
        %342 = vmatprep.subr.mxu0 0.0
        %343 = vmatpush1.xpose.msra.mxu0 %v340
        %344 = vmatprep.subr.mxu0 0.0
        %345 = vmatpush1.xpose.msra.mxu0 0.0
        %346 = vmatprep.subr.mxu0 0.0
        %347 = vmatpush1.xpose.msra.mxu0 0.0
        %348 = vmatprep.subr.mxu0 0.0
        %349 = vmatpush1.xpose.msra.mxu0 0.0
        %350 = vmatprep.subr.mxu0 0.0
        %351 = vmatpush1.xpose.msra.mxu0 0.0
        %352 = vmatprep.subr.mxu0 0.0
        %353 = vmatpush1.xpose.msra.mxu0 0.0
        %354 = vmatprep.subr.mxu0 0.0
        %355 = vmatpush1.xpose.msra.mxu0 0.0
        %356 = vmatprep.subr.mxu0 0.0
        %357 = vmatpush1.xpose.msra.mxu0 0.0
        %358 = vmatprep.subr.mxu0 0.0
        %359 = vmatpush1.xpose.msra.mxu0 0.0
        %360 = vmatprep.subr.mxu0 0.0
        %361 = vmatpush1.xpose.msra.mxu0 0.0
        %362 = vmatprep.subr.mxu0 0.0
        %363 = vmatpush1.xpose.msra.mxu0 0.0
        %364 = vmatprep.subr.mxu0 0.0
        %365 = vmatpush1.xpose.msra.mxu0 0.0
        %366 = vmatprep.subr.mxu0 0.0
        %367 = vmatpush1.xpose.msra.mxu0 0.0
        %368 = vmatprep.subr.mxu0 0.0
        %369 = vmatpush1.xpose.msra.mxu0 0.0
        %370 = vmatprep.subr.mxu0 0.0
        %371 = vmatpush1.xpose.msra.mxu0 0.0
        %372 = vmatprep.subr.mxu0 0.0
        %373 = vmatpush1.xpose.msra.mxu0 0.0
        %374 = vmatprep.subr.mxu0 0.0
        %375 = vmatpush1.xpose.msra.mxu0 0.0
        %376 = vmatprep.subr.mxu0 0.0
        %377 = vmatpush1.xpose.msra.mxu0 0.0
        %378 = vmatprep.subr.mxu0 0.0
        %379 = vmatpush1.xpose.msra.mxu0 0.0
        %380 = vmatprep.subr.mxu0 0.0
        %381 = vmatpush1.xpose.msra.mxu0 0.0
        %382 = vmatprep.subr.mxu0 0.0
        %383 = vmatpush1.xpose.msra.mxu0 0.0
        %384 = vmatprep.subr.mxu0 0.0
        %385 = vmatpush1.xpose.msra.mxu0 0.0
        %386 = vmatprep.subr.mxu0 0.0
        %387 = vmatpush1.xpose.msra.mxu0 0.0
        %388 = vmatprep.subr.mxu0 0.0
        %389 = vmatpush1.xpose.msra.mxu0 0.0
        %390 = vmatprep.subr.mxu0 0.0
        %391 = vmatpush1.xpose.msra.mxu0 0.0
        %392 = vmatprep.subr.mxu0 0.0
        %393 = vmatpush1.xpose.msra.mxu0 0.0
        %394 = vmatprep.subr.mxu0 0.0
        %395 = vmatpush1.xpose.msra.mxu0 0.0
        %396 = vmatprep.subr.mxu0 0.0
        %397 = vmatpush1.xpose.msra.mxu0 0.0
        %398 = vmatprep.subr.mxu0 0.0
        %399 = vmatpush1.xpose.msra.mxu0 0.0
        %400 = vmatprep.subr.mxu0 0.0
        %401 = vmatpush1.xpose.msra.mxu0 0.0
        %402 = vmatprep.subr.mxu0 0.0
        %403 = vmatpush1.xpose.msra.mxu0 0.0
        %404 = vmatprep.subr.mxu0 0.0
        %405 = vmatpush1.xpose.msra.mxu0 0.0
        %406 = vmatprep.mubr.f32.mxu0 0.0
        %407 = vmatmul.mubr.f32.gmra.mrb[0].mxu0 %v337
        %v408 = vpop.f32.mrb[0].mxu0
        %v409 = vadd.f32 0.0, %v408
        %v410 = vpop.f32.mrb[0].mxu0
        %411 = vdwg.mxu0
        %v412 = vsel %vm336, %v324, 0
        %v415 = vsel %vm336, %v273, 0
        %417 = vmatprep.subr.mxu0 0.0
        %418 = vmatpush1.xpose.msra.mxu0 %v415
        %419 = vmatprep.subr.mxu0 0.0
        %420 = vmatpush1.xpose.msra.mxu0 0.0
        %421 = vmatprep.subr.mxu0 0.0
        %422 = vmatpush1.xpose.msra.mxu0 0.0
        %423 = vmatprep.subr.mxu0 0.0
        %424 = vmatpush1.xpose.msra.mxu0 0.0
        %425 = vmatprep.subr.mxu0 0.0
        %426 = vmatpush1.xpose.msra.mxu0 0.0
        %427 = vmatprep.subr.mxu0 0.0
        %428 = vmatpush1.xpose.msra.mxu0 0.0
        %429 = vmatprep.subr.mxu0 0.0
        %430 = vmatpush1.xpose.msra.mxu0 0.0
        %431 = vmatprep.subr.mxu0 0.0
        %432 = vmatpush1.xpose.msra.mxu0 0.0
        %433 = vmatprep.subr.mxu0 0.0
        %434 = vmatpush1.xpose.msra.mxu0 0.0
        %435 = vmatprep.subr.mxu0 0.0
        %436 = vmatpush1.xpose.msra.mxu0 0.0
        %437 = vmatprep.subr.mxu0 0.0
        %438 = vmatpush1.xpose.msra.mxu0 0.0
        %439 = vmatprep.subr.mxu0 0.0
        %440 = vmatpush1.xpose.msra.mxu0 0.0
        %441 = vmatprep.subr.mxu0 0.0
        %442 = vmatpush1.xpose.msra.mxu0 0.0
        %443 = vmatprep.subr.mxu0 0.0
        %444 = vmatpush1.xpose.msra.mxu0 0.0
        %445 = vmatprep.subr.mxu0 0.0
        %446 = vmatpush1.xpose.msra.mxu0 0.0
        %447 = vmatprep.subr.mxu0 0.0
        %448 = vmatpush1.xpose.msra.mxu0 0.0
        %449 = vmatprep.subr.mxu0 0.0
        %450 = vmatpush1.xpose.msra.mxu0 0.0
        %451 = vmatprep.subr.mxu0 0.0
        %452 = vmatpush1.xpose.msra.mxu0 0.0
        %453 = vmatprep.subr.mxu0 0.0
        %454 = vmatpush1.xpose.msra.mxu0 0.0
        %455 = vmatprep.subr.mxu0 0.0
        %456 = vmatpush1.xpose.msra.mxu0 0.0
        %457 = vmatprep.subr.mxu0 0.0
        %458 = vmatpush1.xpose.msra.mxu0 0.0
        %459 = vmatprep.subr.mxu0 0.0
        %460 = vmatpush1.xpose.msra.mxu0 0.0
        %461 = vmatprep.subr.mxu0 0.0
        %462 = vmatpush1.xpose.msra.mxu0 0.0
        %463 = vmatprep.subr.mxu0 0.0
        %464 = vmatpush1.xpose.msra.mxu0 0.0
        %465 = vmatprep.subr.mxu0 0.0
        %466 = vmatpush1.xpose.msra.mxu0 0.0
        %467 = vmatprep.subr.mxu0 0.0
        %468 = vmatpush1.xpose.msra.mxu0 0.0
        %469 = vmatprep.subr.mxu0 0.0
        %470 = vmatpush1.xpose.msra.mxu0 0.0
        %471 = vmatprep.subr.mxu0 0.0
        %472 = vmatpush1.xpose.msra.mxu0 0.0
        %473 = vmatprep.subr.mxu0 0.0
        %474 = vmatpush1.xpose.msra.mxu0 0.0
        %475 = vmatprep.subr.mxu0 0.0
        %476 = vmatpush1.xpose.msra.mxu0 0.0
        %477 = vmatprep.subr.mxu0 0.0
        %478 = vmatpush1.xpose.msra.mxu0 0.0
        %479 = vmatprep.subr.mxu0 0.0
        %480 = vmatpush1.xpose.msra.mxu0 0.0
        %481 = vmatprep.mubr.f32.mxu0 0.0
        %482 = vmatmul.mubr.f32.gmra.mrb[0].mxu0 %v412
        %v483 = vpop.f32.mrb[0].mxu0
        %v484 = vadd.f32 0.0, %v483
        %v485 = vpop.f32.mrb[0].mxu0
        %486 = vdwg.mxu0
        %v487 = vsel %vm336, %v332, 0
        %v490 = vsel %vm336, %v274, 0
        %492 = vmatprep.subr.mxu0 0.0
        %493 = vmatpush1.xpose.msra.mxu0 %v490
        %494 = vmatprep.subr.mxu0 0.0
        %495 = vmatpush1.xpose.msra.mxu0 0.0
        %496 = vmatprep.subr.mxu0 0.0
        %497 = vmatpush1.xpose.msra.mxu0 0.0
        %498 = vmatprep.subr.mxu0 0.0
        %499 = vmatpush1.xpose.msra.mxu0 0.0
        %500 = vmatprep.subr.mxu0 0.0
        %501 = vmatpush1.xpose.msra.mxu0 0.0
        %502 = vmatprep.subr.mxu0 0.0
        %503 = vmatpush1.xpose.msra.mxu0 0.0
        %504 = vmatprep.subr.mxu0 0.0
        %505 = vmatpush1.xpose.msra.mxu0 0.0
        %506 = vmatprep.subr.mxu0 0.0
        %507 = vmatpush1.xpose.msra.mxu0 0.0
        %508 = vmatprep.subr.mxu0 0.0
        %509 = vmatpush1.xpose.msra.mxu0 0.0
        %510 = vmatprep.subr.mxu0 0.0
        %511 = vmatpush1.xpose.msra.mxu0 0.0
        %512 = vmatprep.subr.mxu0 0.0
        %513 = vmatpush1.xpose.msra.mxu0 0.0
        %514 = vmatprep.subr.mxu0 0.0
        %515 = vmatpush1.xpose.msra.mxu0 0.0
        %516 = vmatprep.subr.mxu0 0.0
        %517 = vmatpush1.xpose.msra.mxu0 0.0
        %518 = vmatprep.subr.mxu0 0.0
        %519 = vmatpush1.xpose.msra.mxu0 0.0
        %520 = vmatprep.subr.mxu0 0.0
        %521 = vmatpush1.xpose.msra.mxu0 0.0
        %522 = vmatprep.subr.mxu0 0.0
        %523 = vmatpush1.xpose.msra.mxu0 0.0
        %524 = vmatprep.subr.mxu0 0.0
        %525 = vmatpush1.xpose.msra.mxu0 0.0
        %526 = vmatprep.subr.mxu0 0.0
        %527 = vmatpush1.xpose.msra.mxu0 0.0
        %528 = vmatprep.subr.mxu0 0.0
        %529 = vmatpush1.xpose.msra.mxu0 0.0
        %530 = vmatprep.subr.mxu0 0.0
        %531 = vmatpush1.xpose.msra.mxu0 0.0
        %532 = vmatprep.subr.mxu0 0.0
        %533 = vmatpush1.xpose.msra.mxu0 0.0
        %534 = vmatprep.subr.mxu0 0.0
        %535 = vmatpush1.xpose.msra.mxu0 0.0
        %536 = vmatprep.subr.mxu0 0.0
        %537 = vmatpush1.xpose.msra.mxu0 0.0
        %538 = vmatprep.subr.mxu0 0.0
        %539 = vmatpush1.xpose.msra.mxu0 0.0
        %540 = vmatprep.subr.mxu0 0.0
        %541 = vmatpush1.xpose.msra.mxu0 0.0
        %542 = vmatprep.subr.mxu0 0.0
        %543 = vmatpush1.xpose.msra.mxu0 0.0
        %544 = vmatprep.subr.mxu0 0.0
        %545 = vmatpush1.xpose.msra.mxu0 0.0
        %546 = vmatprep.subr.mxu0 0.0
        %547 = vmatpush1.xpose.msra.mxu0 0.0
        %548 = vmatprep.subr.mxu0 0.0
        %549 = vmatpush1.xpose.msra.mxu0 0.0
        %550 = vmatprep.subr.mxu0 0.0
        %551 = vmatpush1.xpose.msra.mxu0 0.0
        %552 = vmatprep.subr.mxu0 0.0
        %553 = vmatpush1.xpose.msra.mxu0 0.0
        %554 = vmatprep.subr.mxu0 0.0
        %555 = vmatpush1.xpose.msra.mxu0 0.0
        %556 = vmatprep.mubr.f32.mxu0 0.0
        %557 = vmatmul.mubr.f32.gmra.mrb[0].mxu0 %v487
        %v558 = vpop.f32.mrb[0].mxu0
        %v559 = vadd.f32 0.0, %v558
        %v560 = vpop.f32.mrb[0].mxu0
        %561 = vdwg.mxu0
        %v562 = vsel %vm336, %v334, 0
        %v565 = vsel %vm336, %v275, 0
        %567 = vmatprep.subr.mxu0 0.0
        %568 = vmatpush1.xpose.msra.mxu0 %v565
        %569 = vmatprep.subr.mxu0 0.0
        %570 = vmatpush1.xpose.msra.mxu0 0.0
        %571 = vmatprep.subr.mxu0 0.0
        %572 = vmatpush1.xpose.msra.mxu0 0.0
        %573 = vmatprep.subr.mxu0 0.0
        %574 = vmatpush1.xpose.msra.mxu0 0.0
        %575 = vmatprep.subr.mxu0 0.0
        %576 = vmatpush1.xpose.msra.mxu0 0.0
        %577 = vmatprep.subr.mxu0 0.0
        %578 = vmatpush1.xpose.msra.mxu0 0.0
        %579 = vmatprep.subr.mxu0 0.0
        %580 = vmatpush1.xpose.msra.mxu0 0.0
        %581 = vmatprep.subr.mxu0 0.0
        %582 = vmatpush1.xpose.msra.mxu0 0.0
        %583 = vmatprep.subr.mxu0 0.0
        %584 = vmatpush1.xpose.msra.mxu0 0.0
        %585 = vmatprep.subr.mxu0 0.0
        %586 = vmatpush1.xpose.msra.mxu0 0.0
        %587 = vmatprep.subr.mxu0 0.0
        %588 = vmatpush1.xpose.msra.mxu0 0.0
        %589 = vmatprep.subr.mxu0 0.0
        %590 = vmatpush1.xpose.msra.mxu0 0.0
        %591 = vmatprep.subr.mxu0 0.0
        %592 = vmatpush1.xpose.msra.mxu0 0.0
        %593 = vmatprep.subr.mxu0 0.0
        %594 = vmatpush1.xpose.msra.mxu0 0.0
        %595 = vmatprep.subr.mxu0 0.0
        %596 = vmatpush1.xpose.msra.mxu0 0.0
        %597 = vmatprep.subr.mxu0 0.0
        %598 = vmatpush1.xpose.msra.mxu0 0.0
        %599 = vmatprep.subr.mxu0 0.0
        %600 = vmatpush1.xpose.msra.mxu0 0.0
        %601 = vmatprep.subr.mxu0 0.0
        %602 = vmatpush1.xpose.msra.mxu0 0.0
        %603 = vmatprep.subr.mxu0 0.0
        %604 = vmatpush1.xpose.msra.mxu0 0.0
        %605 = vmatprep.subr.mxu0 0.0
        %606 = vmatpush1.xpose.msra.mxu0 0.0
        %607 = vmatprep.subr.mxu0 0.0
        %608 = vmatpush1.xpose.msra.mxu0 0.0
        %609 = vmatprep.subr.mxu0 0.0
        %610 = vmatpush1.xpose.msra.mxu0 0.0
        %611 = vmatprep.subr.mxu0 0.0
        %612 = vmatpush1.xpose.msra.mxu0 0.0
        %613 = vmatprep.subr.mxu0 0.0
        %614 = vmatpush1.xpose.msra.mxu0 0.0
        %615 = vmatprep.subr.mxu0 0.0
        %616 = vmatpush1.xpose.msra.mxu0 0.0
        %617 = vmatprep.subr.mxu0 0.0
        %618 = vmatpush1.xpose.msra.mxu0 0.0
        %619 = vmatprep.subr.mxu0 0.0
        %620 = vmatpush1.xpose.msra.mxu0 0.0
        %621 = vmatprep.subr.mxu0 0.0
        %622 = vmatpush1.xpose.msra.mxu0 0.0
        %623 = vmatprep.subr.mxu0 0.0
        %624 = vmatpush1.xpose.msra.mxu0 0.0
        %625 = vmatprep.subr.mxu0 0.0
        %626 = vmatpush1.xpose.msra.mxu0 0.0
        %627 = vmatprep.subr.mxu0 0.0
        %628 = vmatpush1.xpose.msra.mxu0 0.0
        %629 = vmatprep.subr.mxu0 0.0
        %630 = vmatpush1.xpose.msra.mxu0 0.0
        %631 = vmatprep.mubr.f32.mxu0 0.0
        %632 = vmatmul.mubr.f32.gmra.mrb[0].mxu0 %v562
        %v633 = vpop.f32.mrb[0].mxu0
        %v634 = vadd.f32 0.0, %v633
        %v635 = vpop.f32.mrb[0].mxu0
        %636 = vdwg.mxu0
        %v637 = vsel %vm336, %v317, 0
        %v640 = vsel %vm336, %v276, 0
        %642 = vmatprep.subr.mxu0 0.0
        %643 = vmatpush1.xpose.msra.mxu0 %v640
        %644 = vmatprep.subr.mxu0 0.0
        %645 = vmatpush1.xpose.msra.mxu0 0.0
        %646 = vmatprep.subr.mxu0 0.0
        %647 = vmatpush1.xpose.msra.mxu0 0.0
        %648 = vmatprep.subr.mxu0 0.0
        %649 = vmatpush1.xpose.msra.mxu0 0.0
        %650 = vmatprep.subr.mxu0 0.0
        %651 = vmatpush1.xpose.msra.mxu0 0.0
        %652 = vmatprep.subr.mxu0 0.0
        %653 = vmatpush1.xpose.msra.mxu0 0.0
        %654 = vmatprep.subr.mxu0 0.0
        %655 = vmatpush1.xpose.msra.mxu0 0.0
        %656 = vmatprep.subr.mxu0 0.0
        %657 = vmatpush1.xpose.msra.mxu0 0.0
        %658 = vmatprep.subr.mxu0 0.0
        %659 = vmatpush1.xpose.msra.mxu0 0.0
        %660 = vmatprep.subr.mxu0 0.0
        %661 = vmatpush1.xpose.msra.mxu0 0.0
        %662 = vmatprep.subr.mxu0 0.0
        %663 = vmatpush1.xpose.msra.mxu0 0.0
        %664 = vmatprep.subr.mxu0 0.0
        %665 = vmatpush1.xpose.msra.mxu0 0.0
        %666 = vmatprep.subr.mxu0 0.0
        %667 = vmatpush1.xpose.msra.mxu0 0.0
        %668 = vmatprep.subr.mxu0 0.0
        %669 = vmatpush1.xpose.msra.mxu0 0.0
        %670 = vmatprep.subr.mxu0 0.0
        %671 = vmatpush1.xpose.msra.mxu0 0.0
        %672 = vmatprep.subr.mxu0 0.0
        %673 = vmatpush1.xpose.msra.mxu0 0.0
        %674 = vmatprep.subr.mxu0 0.0
        %675 = vmatpush1.xpose.msra.mxu0 0.0
        %676 = vmatprep.subr.mxu0 0.0
        %677 = vmatpush1.xpose.msra.mxu0 0.0
        %678 = vmatprep.subr.mxu0 0.0
        %679 = vmatpush1.xpose.msra.mxu0 0.0
        %680 = vmatprep.subr.mxu0 0.0
        %681 = vmatpush1.xpose.msra.mxu0 0.0
        %682 = vmatprep.subr.mxu0 0.0
        %683 = vmatpush1.xpose.msra.mxu0 0.0
        %684 = vmatprep.subr.mxu0 0.0
        %685 = vmatpush1.xpose.msra.mxu0 0.0
        %686 = vmatprep.subr.mxu0 0.0
        %687 = vmatpush1.xpose.msra.mxu0 0.0
        %688 = vmatprep.subr.mxu0 0.0
        %689 = vmatpush1.xpose.msra.mxu0 0.0
        %690 = vmatprep.subr.mxu0 0.0
        %691 = vmatpush1.xpose.msra.mxu0 0.0
        %692 = vmatprep.subr.mxu0 0.0
        %693 = vmatpush1.xpose.msra.mxu0 0.0
        %694 = vmatprep.subr.mxu0 0.0
        %695 = vmatpush1.xpose.msra.mxu0 0.0
        %696 = vmatprep.subr.mxu0 0.0
        %697 = vmatpush1.xpose.msra.mxu0 0.0
        %698 = vmatprep.subr.mxu0 0.0
        %699 = vmatpush1.xpose.msra.mxu0 0.0
        %700 = vmatprep.subr.mxu0 0.0
        %701 = vmatpush1.xpose.msra.mxu0 0.0
        %702 = vmatprep.subr.mxu0 0.0
        %703 = vmatpush1.xpose.msra.mxu0 0.0
        %704 = vmatprep.subr.mxu0 0.0
        %705 = vmatpush1.xpose.msra.mxu0 0.0
        %706 = vmatprep.mubr.f32.mxu0 0.0
        %707 = vmatmul.mubr.f32.gmra.mrb[0].mxu0 %v637
        %v708 = vpop.f32.mrb[0].mxu0
        %v709 = vadd.f32 0.0, %v708
        %v710 = vpop.f32.mrb[0].mxu0
        %711 = vdwg.mxu0
        %v712 = vsel %vm336, %v331, 0
        %v715 = vsel %vm336, %v277, 0
        %717 = vmatprep.subr.mxu0 0.0
        %718 = vmatpush1.xpose.msra.mxu0 %v715
        %719 = vmatprep.subr.mxu0 0.0
        %720 = vmatpush1.xpose.msra.mxu0 0.0
        %721 = vmatprep.subr.mxu0 0.0
        %722 = vmatpush1.xpose.msra.mxu0 0.0
        %723 = vmatprep.subr.mxu0 0.0
        %724 = vmatpush1.xpose.msra.mxu0 0.0
        %725 = vmatprep.subr.mxu0 0.0
        %726 = vmatpush1.xpose.msra.mxu0 0.0
        %727 = vmatprep.subr.mxu0 0.0
        %728 = vmatpush1.xpose.msra.mxu0 0.0
        %729 = vmatprep.subr.mxu0 0.0
        %730 = vmatpush1.xpose.msra.mxu0 0.0
        %731 = vmatprep.subr.mxu0 0.0
        %732 = vmatpush1.xpose.msra.mxu0 0.0
        %733 = vmatprep.subr.mxu0 0.0
        %734 = vmatpush1.xpose.msra.mxu0 0.0
        %735 = vmatprep.subr.mxu0 0.0
        %736 = vmatpush1.xpose.msra.mxu0 0.0
        %737 = vmatprep.subr.mxu0 0.0
        %738 = vmatpush1.xpose.msra.mxu0 0.0
        %739 = vmatprep.subr.mxu0 0.0
        %740 = vmatpush1.xpose.msra.mxu0 0.0
        %741 = vmatprep.subr.mxu0 0.0
        %742 = vmatpush1.xpose.msra.mxu0 0.0
        %743 = vmatprep.subr.mxu0 0.0
        %744 = vmatpush1.xpose.msra.mxu0 0.0
        %745 = vmatprep.subr.mxu0 0.0
        %746 = vmatpush1.xpose.msra.mxu0 0.0
        %747 = vmatprep.subr.mxu0 0.0
        %748 = vmatpush1.xpose.msra.mxu0 0.0
        %749 = vmatprep.subr.mxu0 0.0
        %750 = vmatpush1.xpose.msra.mxu0 0.0
        %751 = vmatprep.subr.mxu0 0.0
        %752 = vmatpush1.xpose.msra.mxu0 0.0
        %753 = vmatprep.subr.mxu0 0.0
        %754 = vmatpush1.xpose.msra.mxu0 0.0
        %755 = vmatprep.subr.mxu0 0.0
        %756 = vmatpush1.xpose.msra.mxu0 0.0
        %757 = vmatprep.subr.mxu0 0.0
        %758 = vmatpush1.xpose.msra.mxu0 0.0
        %759 = vmatprep.subr.mxu0 0.0
        %760 = vmatpush1.xpose.msra.mxu0 0.0
        %761 = vmatprep.subr.mxu0 0.0
        %762 = vmatpush1.xpose.msra.mxu0 0.0
        %763 = vmatprep.subr.mxu0 0.0
        %764 = vmatpush1.xpose.msra.mxu0 0.0
        %765 = vmatprep.subr.mxu0 0.0
        %766 = vmatpush1.xpose.msra.mxu0 0.0
        %767 = vmatprep.subr.mxu0 0.0
        %768 = vmatpush1.xpose.msra.mxu0 0.0
        %769 = vmatprep.subr.mxu0 0.0
        %770 = vmatpush1.xpose.msra.mxu0 0.0
        %771 = vmatprep.subr.mxu0 0.0
        %772 = vmatpush1.xpose.msra.mxu0 0.0
        %773 = vmatprep.subr.mxu0 0.0
        %774 = vmatpush1.xpose.msra.mxu0 0.0
        %775 = vmatprep.subr.mxu0 0.0
        %776 = vmatpush1.xpose.msra.mxu0 0.0
        %777 = vmatprep.subr.mxu0 0.0
        %778 = vmatpush1.xpose.msra.mxu0 0.0
        %779 = vmatprep.subr.mxu0 0.0
        %780 = vmatpush1.xpose.msra.mxu0 0.0
        %781 = vmatprep.mubr.f32.mxu0 0.0
        %782 = vmatmul.mubr.f32.gmra.mrb[0].mxu0 %v712
        %v783 = vpop.f32.mrb[0].mxu0
        %v784 = vadd.f32 0.0, %v783
        %v785 = vpop.f32.mrb[0].mxu0
        %786 = vdwg.mxu0
        %v787 = vsel %vm336, %v333, 0
        %v790 = vsel %vm336, %v278, 0
        %792 = vmatprep.subr.mxu0 0.0
        %793 = vmatpush1.xpose.msra.mxu0 %v790
        %794 = vmatprep.subr.mxu0 0.0
        %795 = vmatpush1.xpose.msra.mxu0 0.0
        %796 = vmatprep.subr.mxu0 0.0
        %797 = vmatpush1.xpose.msra.mxu0 0.0
        %798 = vmatprep.subr.mxu0 0.0
        %799 = vmatpush1.xpose.msra.mxu0 0.0
        %800 = vmatprep.subr.mxu0 0.0
        %801 = vmatpush1.xpose.msra.mxu0 0.0
        %802 = vmatprep.subr.mxu0 0.0
        %803 = vmatpush1.xpose.msra.mxu0 0.0
        %804 = vmatprep.subr.mxu0 0.0
        %805 = vmatpush1.xpose.msra.mxu0 0.0
        %806 = vmatprep.subr.mxu0 0.0
        %807 = vmatpush1.xpose.msra.mxu0 0.0
        %808 = vmatprep.subr.mxu0 0.0
        %809 = vmatpush1.xpose.msra.mxu0 0.0
        %810 = vmatprep.subr.mxu0 0.0
        %811 = vmatpush1.xpose.msra.mxu0 0.0
        %812 = vmatprep.subr.mxu0 0.0
        %813 = vmatpush1.xpose.msra.mxu0 0.0
        %814 = vmatprep.subr.mxu0 0.0
        %815 = vmatpush1.xpose.msra.mxu0 0.0
        %816 = vmatprep.subr.mxu0 0.0
        %817 = vmatpush1.xpose.msra.mxu0 0.0
        %818 = vmatprep.subr.mxu0 0.0
        %819 = vmatpush1.xpose.msra.mxu0 0.0
        %820 = vmatprep.subr.mxu0 0.0
        %821 = vmatpush1.xpose.msra.mxu0 0.0
        %822 = vmatprep.subr.mxu0 0.0
        %823 = vmatpush1.xpose.msra.mxu0 0.0
        %824 = vmatprep.subr.mxu0 0.0
        %825 = vmatpush1.xpose.msra.mxu0 0.0
        %826 = vmatprep.subr.mxu0 0.0
        %827 = vmatpush1.xpose.msra.mxu0 0.0
        %828 = vmatprep.subr.mxu0 0.0
        %829 = vmatpush1.xpose.msra.mxu0 0.0
        %830 = vmatprep.subr.mxu0 0.0
        %831 = vmatpush1.xpose.msra.mxu0 0.0
        %832 = vmatprep.subr.mxu0 0.0
        %833 = vmatpush1.xpose.msra.mxu0 0.0
        %834 = vmatprep.subr.mxu0 0.0
        %835 = vmatpush1.xpose.msra.mxu0 0.0
        %836 = vmatprep.subr.mxu0 0.0
        %837 = vmatpush1.xpose.msra.mxu0 0.0
        %838 = vmatprep.subr.mxu0 0.0
        %839 = vmatpush1.xpose.msra.mxu0 0.0
        %840 = vmatprep.subr.mxu0 0.0
        %841 = vmatpush1.xpose.msra.mxu0 0.0
        %842 = vmatprep.subr.mxu0 0.0
        %843 = vmatpush1.xpose.msra.mxu0 0.0
        %844 = vmatprep.subr.mxu0 0.0
        %845 = vmatpush1.xpose.msra.mxu0 0.0
        %846 = vmatprep.subr.mxu0 0.0
        %847 = vmatpush1.xpose.msra.mxu0 0.0
        %848 = vmatprep.subr.mxu0 0.0
        %849 = vmatpush1.xpose.msra.mxu0 0.0
        %850 = vmatprep.subr.mxu0 0.0
        %851 = vmatpush1.xpose.msra.mxu0 0.0
        %852 = vmatprep.subr.mxu0 0.0
        %853 = vmatpush1.xpose.msra.mxu0 0.0
        %854 = vmatprep.subr.mxu0 0.0
        %855 = vmatpush1.xpose.msra.mxu0 0.0
        %856 = vmatprep.mubr.f32.mxu0 0.0
        %857 = vmatmul.mubr.f32.gmra.mrb[0].mxu0 %v787
        %v858 = vpop.f32.mrb[0].mxu0
        %v859 = vadd.f32 0.0, %v858
        %v860 = vpop.f32.mrb[0].mxu0
        %861 = vdwg.mxu0
        %v862 = vsel %vm336, %v335, 0
        %v865 = vsel %vm336, %v279, 0
        %867 = vmatprep.subr.mxu0 0.0
        %868 = vmatpush1.xpose.msra.mxu0 %v865
        %869 = vmatprep.subr.mxu0 0.0
        %870 = vmatpush1.xpose.msra.mxu0 0.0
        %871 = vmatprep.subr.mxu0 0.0
        %872 = vmatpush1.xpose.msra.mxu0 0.0
        %873 = vmatprep.subr.mxu0 0.0
        %874 = vmatpush1.xpose.msra.mxu0 0.0
        %875 = vmatprep.subr.mxu0 0.0
        %876 = vmatpush1.xpose.msra.mxu0 0.0
        %877 = vmatprep.subr.mxu0 0.0
        %878 = vmatpush1.xpose.msra.mxu0 0.0
        %879 = vmatprep.subr.mxu0 0.0
        %880 = vmatpush1.xpose.msra.mxu0 0.0
        %881 = vmatprep.subr.mxu0 0.0
        %882 = vmatpush1.xpose.msra.mxu0 0.0
        %883 = vmatprep.subr.mxu0 0.0
        %884 = vmatpush1.xpose.msra.mxu0 0.0
        %885 = vmatprep.subr.mxu0 0.0
        %886 = vmatpush1.xpose.msra.mxu0 0.0
        %887 = vmatprep.subr.mxu0 0.0
        %888 = vmatpush1.xpose.msra.mxu0 0.0
        %889 = vmatprep.subr.mxu0 0.0
        %890 = vmatpush1.xpose.msra.mxu0 0.0
        %891 = vmatprep.subr.mxu0 0.0
        %892 = vmatpush1.xpose.msra.mxu0 0.0
        %893 = vmatprep.subr.mxu0 0.0
        %894 = vmatpush1.xpose.msra.mxu0 0.0
        %895 = vmatprep.subr.mxu0 0.0
        %896 = vmatpush1.xpose.msra.mxu0 0.0
        %897 = vmatprep.subr.mxu0 0.0
        %898 = vmatpush1.xpose.msra.mxu0 0.0
        %899 = vmatprep.subr.mxu0 0.0
        %900 = vmatpush1.xpose.msra.mxu0 0.0
        %901 = vmatprep.subr.mxu0 0.0
        %902 = vmatpush1.xpose.msra.mxu0 0.0
        %903 = vmatprep.subr.mxu0 0.0
        %904 = vmatpush1.xpose.msra.mxu0 0.0
        %905 = vmatprep.subr.mxu0 0.0
        %906 = vmatpush1.xpose.msra.mxu0 0.0
        %907 = vmatprep.subr.mxu0 0.0
        %908 = vmatpush1.xpose.msra.mxu0 0.0
        %909 = vmatprep.subr.mxu0 0.0
        %910 = vmatpush1.xpose.msra.mxu0 0.0
        %911 = vmatprep.subr.mxu0 0.0
        %912 = vmatpush1.xpose.msra.mxu0 0.0
        %913 = vmatprep.subr.mxu0 0.0
        %914 = vmatpush1.xpose.msra.mxu0 0.0
        %915 = vmatprep.subr.mxu0 0.0
        %916 = vmatpush1.xpose.msra.mxu0 0.0
        %917 = vmatprep.subr.mxu0 0.0
        %918 = vmatpush1.xpose.msra.mxu0 0.0
        %919 = vmatprep.subr.mxu0 0.0
        %920 = vmatpush1.xpose.msra.mxu0 0.0
        %921 = vmatprep.subr.mxu0 0.0
        %922 = vmatpush1.xpose.msra.mxu0 0.0
        %923 = vmatprep.subr.mxu0 0.0
        %924 = vmatpush1.xpose.msra.mxu0 0.0
        %925 = vmatprep.subr.mxu0 0.0
        %926 = vmatpush1.xpose.msra.mxu0 0.0
        %927 = vmatprep.subr.mxu0 0.0
        %928 = vmatpush1.xpose.msra.mxu0 0.0
        %929 = vmatprep.subr.mxu0 0.0
        %930 = vmatpush1.xpose.msra.mxu0 0.0
        %931 = vmatprep.mubr.f32.mxu0 0.0
        %932 = vmatmul.mubr.f32.gmra.mrb[0].mxu0 %v862
        %v933 = vpop.f32.mrb[0].mxu0
        %v934 = vadd.f32 0.0, %v933
        %v935 = vpop.f32.mrb[0].mxu0
        %936 = vdwg.mxu0
        %v945 = vrot.slane %v484, 7
        %vm946 = vcmask 1041409
        %v947 = vsel %vm946, %v945, %v409
        %v948 = vrot.slane %v559, 6
        %vm949 = vcmask 1042434
        %v950 = vsel %vm949, %v948, %v947
        %v951 = vrot.slane %v634, 5
        %vm952 = vcmask 1043459
        %v953 = vsel %vm952, %v951, %v950
        %v954 = vrot.slane %v709, 4
        %vm955 = vcmask 1044484
        %v956 = vsel %vm955, %v954, %v953
        %v957 = vrot.slane %v784, 3
        %vm958 = vcmask 1045509
        %v959 = vsel %vm958, %v957, %v956
        %v960 = vrot.slane %v859, 2
        %vm961 = vcmask 1046534
        %v962 = vsel %vm961, %v960, %v959
        %v963 = vrot.slane %v934, 1
        %vm964 = vcmask 1047559
        %v965 = vsel %vm964, %v963, %v962
        %v967 = vsel %vm281, %v965, -1e+20
        %vm968 = vcmask 64512
        %v969 = vsel %vm968, %v967, -inf
        %970 = vmax.xlane.f32.xlu0 %v969
        %v971 = vpop.xlane.xlu0 %970
        %v972 = vsub.f32 %v967, %v971
        %v973 = vmul.f32 %v972, 1.442695
        %v974 = vpow.pop %v973
        %v975 = vsel %vm968, %v974, 0.0
        %976 = vadd.xlane.f32.xlu0 %v975
        %v977 = vpop.xlane.xlu0 %976
        %v978 = vrcp.pop %v977
        %v979 = vmul.f32 %v974, %v978
        %v981 = vcombine.high %v979, %v979
        %v983 = vunpack.c.l.s4 1966171168
        %v984 = vunpack.c.0.s8 %v983
        %v985 = vlaneseq
        %v986 = vshrl.u32 %v985, 7
        %v987 = vsub.s32 %v984, %v986
        %v988 = vrot.slane %v979, %v987
        %v990 = vunpack.c.l.s4 1966171168
        %v991 = vunpack.c.0.s8 %v990
        %v992 = vlaneseq
        %v993 = vshrl.u32 %v992, 7
        %v994 = vsub.s32 %v991, %v993
        %v995 = vrot.slane %v981, %v994
        %v996 = vcombine.high %v988, %v988
        %v997 = vcombine.high %v995, %v995
        %v999 = vunpack.c.l.s4 1966171168
        %v1000 = vunpack.c.0.s8 %v999
        %v1001 = vlaneseq
        %v1002 = vshrl.u32 %v1001, 7
        %v1003 = vsub.s32 %v1000, %v1002
        %v1004 = vrot.slane %v988, %v1003
        %v1006 = vunpack.c.l.s4 1966171168
        %v1007 = vunpack.c.0.s8 %v1006
        %v1008 = vlaneseq
        %v1009 = vshrl.u32 %v1008, 7
        %v1010 = vsub.s32 %v1007, %v1009
        %v1011 = vrot.slane %v995, %v1010
        %v1013 = vunpack.c.l.s4 1966171168
        %v1014 = vunpack.c.0.s8 %v1013
        %v1015 = vlaneseq
        %v1016 = vshrl.u32 %v1015, 7
        %v1017 = vsub.s32 %v1014, %v1016
        %v1018 = vrot.slane %v996, %v1017
        %v1020 = vunpack.c.l.s4 1966171168
        %v1021 = vunpack.c.0.s8 %v1020
        %v1022 = vlaneseq
        %v1023 = vshrl.u32 %v1022, 7
        %v1024 = vsub.s32 %v1021, %v1023
        %v1025 = vrot.slane %v997, %v1024
        %v1026 = vcombine.high %v1004, %v1004
        %v1027 = vcombine.high %v1011, %v1011
        %v1028 = vcombine.high %v1018, %v1018
        %v1029 = vcombine.high %v1025, %v1025
        %v1030 = vsel %vm968, %v1004, 0
        %1032 = vmatprep.subr.mxu0 0.0
        %1033 = vmatpush1.msra.mxu0 %v272
        %1034 = vmatprep.subr.mxu0 0.0
        %1035 = vmatpush1.msra.mxu0 0.0
        %1036 = vmatprep.subr.mxu0 0.0
        %1037 = vmatpush1.msra.mxu0 0.0
        %1038 = vmatprep.subr.mxu0 0.0
        %1039 = vmatpush1.msra.mxu0 0.0
        %1040 = vmatprep.subr.mxu0 0.0
        %1041 = vmatpush1.msra.mxu0 0.0
        %1042 = vmatprep.subr.mxu0 0.0
        %1043 = vmatpush1.msra.mxu0 0.0
        %1044 = vmatprep.subr.mxu0 0.0
        %1045 = vmatpush1.msra.mxu0 0.0
        %1046 = vmatprep.subr.mxu0 0.0
        %1047 = vmatpush1.msra.mxu0 0.0
        %1048 = vmatprep.subr.mxu0 0.0
        %1049 = vmatpush1.msra.mxu0 0.0
        %1050 = vmatprep.subr.mxu0 0.0
        %1051 = vmatpush1.msra.mxu0 0.0
        %1052 = vmatprep.subr.mxu0 0.0
        %1053 = vmatpush1.msra.mxu0 0.0
        %1054 = vmatprep.subr.mxu0 0.0
        %1055 = vmatpush1.msra.mxu0 0.0
        %1056 = vmatprep.subr.mxu0 0.0
        %1057 = vmatpush1.msra.mxu0 0.0
        %1058 = vmatprep.subr.mxu0 0.0
        %1059 = vmatpush1.msra.mxu0 0.0
        %1060 = vmatprep.subr.mxu0 0.0
        %1061 = vmatpush1.msra.mxu0 0.0
        %1062 = vmatprep.subr.mxu0 0.0
        %1063 = vmatpush1.msra.mxu0 0.0
        %1064 = vmatprep.subr.mxu0 0.0
        %1065 = vmatpush1.msra.mxu0 0.0
        %1066 = vmatprep.subr.mxu0 0.0
        %1067 = vmatpush1.msra.mxu0 0.0
        %1068 = vmatprep.subr.mxu0 0.0
        %1069 = vmatpush1.msra.mxu0 0.0
        %1070 = vmatprep.subr.mxu0 0.0
        %1071 = vmatpush1.msra.mxu0 0.0
        %1072 = vmatprep.subr.mxu0 0.0
        %1073 = vmatpush1.msra.mxu0 0.0
        %1074 = vmatprep.subr.mxu0 0.0
        %1075 = vmatpush1.msra.mxu0 0.0
        %1076 = vmatprep.subr.mxu0 0.0
        %1077 = vmatpush1.msra.mxu0 0.0
        %1078 = vmatprep.subr.mxu0 0.0
        %1079 = vmatpush1.msra.mxu0 0.0
        %1080 = vmatprep.subr.mxu0 0.0
        %1081 = vmatpush1.msra.mxu0 0.0
        %1082 = vmatprep.subr.mxu0 0.0
        %1083 = vmatpush1.msra.mxu0 0.0
        %1084 = vmatprep.subr.mxu0 0.0
        %1085 = vmatpush1.msra.mxu0 0.0
        %1086 = vmatprep.subr.mxu0 0.0
        %1087 = vmatpush1.msra.mxu0 0.0
        %1088 = vmatprep.subr.mxu0 0.0
        %1089 = vmatpush1.msra.mxu0 0.0
        %1090 = vmatprep.subr.mxu0 0.0
        %1091 = vmatpush1.msra.mxu0 0.0
        %1092 = vmatprep.subr.mxu0 0.0
        %1093 = vmatpush1.msra.mxu0 0.0
        %1094 = vmatprep.subr.mxu0 0.0
        %1095 = vmatpush1.msra.mxu0 0.0
        %1096 = vmatprep.mubr.f32.mxu0 0.0
        %1097 = vmatmul.mubr.f32.gmra.mrb[0].mxu0 %v1030
        %v1098 = vpop.f32.mrb[0].mxu0
        %v1099 = vadd.f32 0.0, %v1098
        %v1100 = vpop.f32.mrb[0].mxu0
        %1101 = vdwg.mxu0
        %v1102 = vsel %vm968, %v1018, 0
        %1104 = vmatprep.subr.mxu0 0.0
        %1105 = vmatpush1.msra.mxu0 %v273
        %1106 = vmatprep.subr.mxu0 0.0
        %1107 = vmatpush1.msra.mxu0 0.0
        %1108 = vmatprep.subr.mxu0 0.0
        %1109 = vmatpush1.msra.mxu0 0.0
        %1110 = vmatprep.subr.mxu0 0.0
        %1111 = vmatpush1.msra.mxu0 0.0
        %1112 = vmatprep.subr.mxu0 0.0
        %1113 = vmatpush1.msra.mxu0 0.0
        %1114 = vmatprep.subr.mxu0 0.0
        %1115 = vmatpush1.msra.mxu0 0.0
        %1116 = vmatprep.subr.mxu0 0.0
        %1117 = vmatpush1.msra.mxu0 0.0
        %1118 = vmatprep.subr.mxu0 0.0
        %1119 = vmatpush1.msra.mxu0 0.0
        %1120 = vmatprep.subr.mxu0 0.0
        %1121 = vmatpush1.msra.mxu0 0.0
        %1122 = vmatprep.subr.mxu0 0.0
        %1123 = vmatpush1.msra.mxu0 0.0
        %1124 = vmatprep.subr.mxu0 0.0
        %1125 = vmatpush1.msra.mxu0 0.0
        %1126 = vmatprep.subr.mxu0 0.0
        %1127 = vmatpush1.msra.mxu0 0.0
        %1128 = vmatprep.subr.mxu0 0.0
        %1129 = vmatpush1.msra.mxu0 0.0
        %1130 = vmatprep.subr.mxu0 0.0
        %1131 = vmatpush1.msra.mxu0 0.0
        %1132 = vmatprep.subr.mxu0 0.0
        %1133 = vmatpush1.msra.mxu0 0.0
        %1134 = vmatprep.subr.mxu0 0.0
        %1135 = vmatpush1.msra.mxu0 0.0
        %1136 = vmatprep.subr.mxu0 0.0
        %1137 = vmatpush1.msra.mxu0 0.0
        %1138 = vmatprep.subr.mxu0 0.0
        %1139 = vmatpush1.msra.mxu0 0.0
        %1140 = vmatprep.subr.mxu0 0.0
        %1141 = vmatpush1.msra.mxu0 0.0
        %1142 = vmatprep.subr.mxu0 0.0
        %1143 = vmatpush1.msra.mxu0 0.0
        %1144 = vmatprep.subr.mxu0 0.0
        %1145 = vmatpush1.msra.mxu0 0.0
        %1146 = vmatprep.subr.mxu0 0.0
        %1147 = vmatpush1.msra.mxu0 0.0
        %1148 = vmatprep.subr.mxu0 0.0
        %1149 = vmatpush1.msra.mxu0 0.0
        %1150 = vmatprep.subr.mxu0 0.0
        %1151 = vmatpush1.msra.mxu0 0.0
        %1152 = vmatprep.subr.mxu0 0.0
        %1153 = vmatpush1.msra.mxu0 0.0
        %1154 = vmatprep.subr.mxu0 0.0
        %1155 = vmatpush1.msra.mxu0 0.0
        %1156 = vmatprep.subr.mxu0 0.0
        %1157 = vmatpush1.msra.mxu0 0.0
        %1158 = vmatprep.subr.mxu0 0.0
        %1159 = vmatpush1.msra.mxu0 0.0
        %1160 = vmatprep.subr.mxu0 0.0
        %1161 = vmatpush1.msra.mxu0 0.0
        %1162 = vmatprep.subr.mxu0 0.0
        %1163 = vmatpush1.msra.mxu0 0.0
        %1164 = vmatprep.subr.mxu0 0.0
        %1165 = vmatpush1.msra.mxu0 0.0
        %1166 = vmatprep.subr.mxu0 0.0
        %1167 = vmatpush1.msra.mxu0 0.0
        %1168 = vmatprep.mubr.f32.mxu0 0.0
        %1169 = vmatmul.mubr.f32.gmra.mrb[0].mxu0 %v1102
        %v1170 = vpop.f32.mrb[0].mxu0
        %v1171 = vadd.f32 0.0, %v1170
        %v1172 = vpop.f32.mrb[0].mxu0
        %1173 = vdwg.mxu0
        %v1174 = vsel %vm968, %v1026, 0
        %1176 = vmatprep.subr.mxu0 0.0
        %1177 = vmatpush1.msra.mxu0 %v274
        %1178 = vmatprep.subr.mxu0 0.0
        %1179 = vmatpush1.msra.mxu0 0.0
        %1180 = vmatprep.subr.mxu0 0.0
        %1181 = vmatpush1.msra.mxu0 0.0
        %1182 = vmatprep.subr.mxu0 0.0
        %1183 = vmatpush1.msra.mxu0 0.0
        %1184 = vmatprep.subr.mxu0 0.0
        %1185 = vmatpush1.msra.mxu0 0.0
        %1186 = vmatprep.subr.mxu0 0.0
        %1187 = vmatpush1.msra.mxu0 0.0
        %1188 = vmatprep.subr.mxu0 0.0
        %1189 = vmatpush1.msra.mxu0 0.0
        %1190 = vmatprep.subr.mxu0 0.0
        %1191 = vmatpush1.msra.mxu0 0.0
        %1192 = vmatprep.subr.mxu0 0.0
        %1193 = vmatpush1.msra.mxu0 0.0
        %1194 = vmatprep.subr.mxu0 0.0
        %1195 = vmatpush1.msra.mxu0 0.0
        %1196 = vmatprep.subr.mxu0 0.0
        %1197 = vmatpush1.msra.mxu0 0.0
        %1198 = vmatprep.subr.mxu0 0.0
        %1199 = vmatpush1.msra.mxu0 0.0
        %1200 = vmatprep.subr.mxu0 0.0
        %1201 = vmatpush1.msra.mxu0 0.0
        %1202 = vmatprep.subr.mxu0 0.0
        %1203 = vmatpush1.msra.mxu0 0.0
        %1204 = vmatprep.subr.mxu0 0.0
        %1205 = vmatpush1.msra.mxu0 0.0
        %1206 = vmatprep.subr.mxu0 0.0
        %1207 = vmatpush1.msra.mxu0 0.0
        %1208 = vmatprep.subr.mxu0 0.0
        %1209 = vmatpush1.msra.mxu0 0.0
        %1210 = vmatprep.subr.mxu0 0.0
        %1211 = vmatpush1.msra.mxu0 0.0
        %1212 = vmatprep.subr.mxu0 0.0
        %1213 = vmatpush1.msra.mxu0 0.0
        %1214 = vmatprep.subr.mxu0 0.0
        %1215 = vmatpush1.msra.mxu0 0.0
        %1216 = vmatprep.subr.mxu0 0.0
        %1217 = vmatpush1.msra.mxu0 0.0
        %1218 = vmatprep.subr.mxu0 0.0
        %1219 = vmatpush1.msra.mxu0 0.0
        %1220 = vmatprep.subr.mxu0 0.0
        %1221 = vmatpush1.msra.mxu0 0.0
        %1222 = vmatprep.subr.mxu0 0.0
        %1223 = vmatpush1.msra.mxu0 0.0
        %1224 = vmatprep.subr.mxu0 0.0
        %1225 = vmatpush1.msra.mxu0 0.0
        %1226 = vmatprep.subr.mxu0 0.0
        %1227 = vmatpush1.msra.mxu0 0.0
        %1228 = vmatprep.subr.mxu0 0.0
        %1229 = vmatpush1.msra.mxu0 0.0
        %1230 = vmatprep.subr.mxu0 0.0
        %1231 = vmatpush1.msra.mxu0 0.0
        %1232 = vmatprep.subr.mxu0 0.0
        %1233 = vmatpush1.msra.mxu0 0.0
        %1234 = vmatprep.subr.mxu0 0.0
        %1235 = vmatpush1.msra.mxu0 0.0
        %1236 = vmatprep.subr.mxu0 0.0
        %1237 = vmatpush1.msra.mxu0 0.0
        %1238 = vmatprep.subr.mxu0 0.0
        %1239 = vmatpush1.msra.mxu0 0.0
        %1240 = vmatprep.mubr.f32.mxu0 0.0
        %1241 = vmatmul.mubr.f32.gmra.mrb[0].mxu0 %v1174
        %v1242 = vpop.f32.mrb[0].mxu0
        %v1243 = vadd.f32 0.0, %v1242
        %v1244 = vpop.f32.mrb[0].mxu0
        %1245 = vdwg.mxu0
        %v1246 = vsel %vm968, %v1028, 0
        %1248 = vmatprep.subr.mxu0 0.0
        %1249 = vmatpush1.msra.mxu0 %v275
        %1250 = vmatprep.subr.mxu0 0.0
        %1251 = vmatpush1.msra.mxu0 0.0
        %1252 = vmatprep.subr.mxu0 0.0
        %1253 = vmatpush1.msra.mxu0 0.0
        %1254 = vmatprep.subr.mxu0 0.0
        %1255 = vmatpush1.msra.mxu0 0.0
        %1256 = vmatprep.subr.mxu0 0.0
        %1257 = vmatpush1.msra.mxu0 0.0
        %1258 = vmatprep.subr.mxu0 0.0
        %1259 = vmatpush1.msra.mxu0 0.0
        %1260 = vmatprep.subr.mxu0 0.0
        %1261 = vmatpush1.msra.mxu0 0.0
        %1262 = vmatprep.subr.mxu0 0.0
        %1263 = vmatpush1.msra.mxu0 0.0
        %1264 = vmatprep.subr.mxu0 0.0
        %1265 = vmatpush1.msra.mxu0 0.0
        %1266 = vmatprep.subr.mxu0 0.0
        %1267 = vmatpush1.msra.mxu0 0.0
        %1268 = vmatprep.subr.mxu0 0.0
        %1269 = vmatpush1.msra.mxu0 0.0
        %1270 = vmatprep.subr.mxu0 0.0
        %1271 = vmatpush1.msra.mxu0 0.0
        %1272 = vmatprep.subr.mxu0 0.0
        %1273 = vmatpush1.msra.mxu0 0.0
        %1274 = vmatprep.subr.mxu0 0.0
        %1275 = vmatpush1.msra.mxu0 0.0
        %1276 = vmatprep.subr.mxu0 0.0
        %1277 = vmatpush1.msra.mxu0 0.0
        %1278 = vmatprep.subr.mxu0 0.0
        %1279 = vmatpush1.msra.mxu0 0.0
        %1280 = vmatprep.subr.mxu0 0.0
        %1281 = vmatpush1.msra.mxu0 0.0
        %1282 = vmatprep.subr.mxu0 0.0
        %1283 = vmatpush1.msra.mxu0 0.0
        %1284 = vmatprep.subr.mxu0 0.0
        %1285 = vmatpush1.msra.mxu0 0.0
        %1286 = vmatprep.subr.mxu0 0.0
        %1287 = vmatpush1.msra.mxu0 0.0
        %1288 = vmatprep.subr.mxu0 0.0
        %1289 = vmatpush1.msra.mxu0 0.0
        %1290 = vmatprep.subr.mxu0 0.0
        %1291 = vmatpush1.msra.mxu0 0.0
        %1292 = vmatprep.subr.mxu0 0.0
        %1293 = vmatpush1.msra.mxu0 0.0
        %1294 = vmatprep.subr.mxu0 0.0
        %1295 = vmatpush1.msra.mxu0 0.0
        %1296 = vmatprep.subr.mxu0 0.0
        %1297 = vmatpush1.msra.mxu0 0.0
        %1298 = vmatprep.subr.mxu0 0.0
        %1299 = vmatpush1.msra.mxu0 0.0
        %1300 = vmatprep.subr.mxu0 0.0
        %1301 = vmatpush1.msra.mxu0 0.0
        %1302 = vmatprep.subr.mxu0 0.0
        %1303 = vmatpush1.msra.mxu0 0.0
        %1304 = vmatprep.subr.mxu0 0.0
        %1305 = vmatpush1.msra.mxu0 0.0
        %1306 = vmatprep.subr.mxu0 0.0
        %1307 = vmatpush1.msra.mxu0 0.0
        %1308 = vmatprep.subr.mxu0 0.0
        %1309 = vmatpush1.msra.mxu0 0.0
        %1310 = vmatprep.subr.mxu0 0.0
        %1311 = vmatpush1.msra.mxu0 0.0
        %1312 = vmatprep.mubr.f32.mxu0 0.0
        %1313 = vmatmul.mubr.f32.gmra.mrb[0].mxu0 %v1246
        %v1314 = vpop.f32.mrb[0].mxu0
        %v1315 = vadd.f32 0.0, %v1314
        %v1316 = vpop.f32.mrb[0].mxu0
        %1317 = vdwg.mxu0
        %v1318 = vsel %vm968, %v1011, 0
        %1320 = vmatprep.subr.mxu0 0.0
        %1321 = vmatpush1.msra.mxu0 %v276
        %1322 = vmatprep.subr.mxu0 0.0
        %1323 = vmatpush1.msra.mxu0 0.0
        %1324 = vmatprep.subr.mxu0 0.0
        %1325 = vmatpush1.msra.mxu0 0.0
        %1326 = vmatprep.subr.mxu0 0.0
        %1327 = vmatpush1.msra.mxu0 0.0
        %1328 = vmatprep.subr.mxu0 0.0
        %1329 = vmatpush1.msra.mxu0 0.0
        %1330 = vmatprep.subr.mxu0 0.0
        %1331 = vmatpush1.msra.mxu0 0.0
        %1332 = vmatprep.subr.mxu0 0.0
        %1333 = vmatpush1.msra.mxu0 0.0
        %1334 = vmatprep.subr.mxu0 0.0
        %1335 = vmatpush1.msra.mxu0 0.0
        %1336 = vmatprep.subr.mxu0 0.0
        %1337 = vmatpush1.msra.mxu0 0.0
        %1338 = vmatprep.subr.mxu0 0.0
        %1339 = vmatpush1.msra.mxu0 0.0
        %1340 = vmatprep.subr.mxu0 0.0
        %1341 = vmatpush1.msra.mxu0 0.0
        %1342 = vmatprep.subr.mxu0 0.0
        %1343 = vmatpush1.msra.mxu0 0.0
        %1344 = vmatprep.subr.mxu0 0.0
        %1345 = vmatpush1.msra.mxu0 0.0
        %1346 = vmatprep.subr.mxu0 0.0
        %1347 = vmatpush1.msra.mxu0 0.0
        %1348 = vmatprep.subr.mxu0 0.0
        %1349 = vmatpush1.msra.mxu0 0.0
        %1350 = vmatprep.subr.mxu0 0.0
        %1351 = vmatpush1.msra.mxu0 0.0
        %1352 = vmatprep.subr.mxu0 0.0
        %1353 = vmatpush1.msra.mxu0 0.0
        %1354 = vmatprep.subr.mxu0 0.0
        %1355 = vmatpush1.msra.mxu0 0.0
        %1356 = vmatprep.subr.mxu0 0.0
        %1357 = vmatpush1.msra.mxu0 0.0
        %1358 = vmatprep.subr.mxu0 0.0
        %1359 = vmatpush1.msra.mxu0 0.0
        %1360 = vmatprep.subr.mxu0 0.0
        %1361 = vmatpush1.msra.mxu0 0.0
        %1362 = vmatprep.subr.mxu0 0.0
        %1363 = vmatpush1.msra.mxu0 0.0
        %1364 = vmatprep.subr.mxu0 0.0
        %1365 = vmatpush1.msra.mxu0 0.0
        %1366 = vmatprep.subr.mxu0 0.0
        %1367 = vmatpush1.msra.mxu0 0.0
        %1368 = vmatprep.subr.mxu0 0.0
        %1369 = vmatpush1.msra.mxu0 0.0
        %1370 = vmatprep.subr.mxu0 0.0
        %1371 = vmatpush1.msra.mxu0 0.0
        %1372 = vmatprep.subr.mxu0 0.0
        %1373 = vmatpush1.msra.mxu0 0.0
        %1374 = vmatprep.subr.mxu0 0.0
        %1375 = vmatpush1.msra.mxu0 0.0
        %1376 = vmatprep.subr.mxu0 0.0
        %1377 = vmatpush1.msra.mxu0 0.0
        %1378 = vmatprep.subr.mxu0 0.0
        %1379 = vmatpush1.msra.mxu0 0.0
        %1380 = vmatprep.subr.mxu0 0.0
        %1381 = vmatpush1.msra.mxu0 0.0
        %1382 = vmatprep.subr.mxu0 0.0
        %1383 = vmatpush1.msra.mxu0 0.0
        %1384 = vmatprep.mubr.f32.mxu0 0.0
        %1385 = vmatmul.mubr.f32.gmra.mrb[0].mxu0 %v1318
        %v1386 = vpop.f32.mrb[0].mxu0
        %v1387 = vadd.f32 0.0, %v1386
        %v1388 = vpop.f32.mrb[0].mxu0
        %1389 = vdwg.mxu0
        %v1390 = vsel %vm968, %v1025, 0
        %1392 = vmatprep.subr.mxu0 0.0
        %1393 = vmatpush1.msra.mxu0 %v277
        %1394 = vmatprep.subr.mxu0 0.0
        %1395 = vmatpush1.msra.mxu0 0.0
        %1396 = vmatprep.subr.mxu0 0.0
        %1397 = vmatpush1.msra.mxu0 0.0
        %1398 = vmatprep.subr.mxu0 0.0
        %1399 = vmatpush1.msra.mxu0 0.0
        %1400 = vmatprep.subr.mxu0 0.0
        %1401 = vmatpush1.msra.mxu0 0.0
        %1402 = vmatprep.subr.mxu0 0.0
        %1403 = vmatpush1.msra.mxu0 0.0
        %1404 = vmatprep.subr.mxu0 0.0
        %1405 = vmatpush1.msra.mxu0 0.0
        %1406 = vmatprep.subr.mxu0 0.0
        %1407 = vmatpush1.msra.mxu0 0.0
        %1408 = vmatprep.subr.mxu0 0.0
        %1409 = vmatpush1.msra.mxu0 0.0
        %1410 = vmatprep.subr.mxu0 0.0
        %1411 = vmatpush1.msra.mxu0 0.0
        %1412 = vmatprep.subr.mxu0 0.0
        %1413 = vmatpush1.msra.mxu0 0.0
        %1414 = vmatprep.subr.mxu0 0.0
        %1415 = vmatpush1.msra.mxu0 0.0
        %1416 = vmatprep.subr.mxu0 0.0
        %1417 = vmatpush1.msra.mxu0 0.0
        %1418 = vmatprep.subr.mxu0 0.0
        %1419 = vmatpush1.msra.mxu0 0.0
        %1420 = vmatprep.subr.mxu0 0.0
        %1421 = vmatpush1.msra.mxu0 0.0
        %1422 = vmatprep.subr.mxu0 0.0
        %1423 = vmatpush1.msra.mxu0 0.0
        %1424 = vmatprep.subr.mxu0 0.0
        %1425 = vmatpush1.msra.mxu0 0.0
        %1426 = vmatprep.subr.mxu0 0.0
        %1427 = vmatpush1.msra.mxu0 0.0
        %1428 = vmatprep.subr.mxu0 0.0
        %1429 = vmatpush1.msra.mxu0 0.0
        %1430 = vmatprep.subr.mxu0 0.0
        %1431 = vmatpush1.msra.mxu0 0.0
        %1432 = vmatprep.subr.mxu0 0.0
        %1433 = vmatpush1.msra.mxu0 0.0
        %1434 = vmatprep.subr.mxu0 0.0
        %1435 = vmatpush1.msra.mxu0 0.0
        %1436 = vmatprep.subr.mxu0 0.0
        %1437 = vmatpush1.msra.mxu0 0.0
        %1438 = vmatprep.subr.mxu0 0.0
        %1439 = vmatpush1.msra.mxu0 0.0
        %1440 = vmatprep.subr.mxu0 0.0
        %1441 = vmatpush1.msra.mxu0 0.0
        %1442 = vmatprep.subr.mxu0 0.0
        %1443 = vmatpush1.msra.mxu0 0.0
        %1444 = vmatprep.subr.mxu0 0.0
        %1445 = vmatpush1.msra.mxu0 0.0
        %1446 = vmatprep.subr.mxu0 0.0
        %1447 = vmatpush1.msra.mxu0 0.0
        %1448 = vmatprep.subr.mxu0 0.0
        %1449 = vmatpush1.msra.mxu0 0.0
        %1450 = vmatprep.subr.mxu0 0.0
        %1451 = vmatpush1.msra.mxu0 0.0
        %1452 = vmatprep.subr.mxu0 0.0
        %1453 = vmatpush1.msra.mxu0 0.0
        %1454 = vmatprep.subr.mxu0 0.0
        %1455 = vmatpush1.msra.mxu0 0.0
        %1456 = vmatprep.mubr.f32.mxu0 0.0
        %1457 = vmatmul.mubr.f32.gmra.mrb[0].mxu0 %v1390
        %v1458 = vpop.f32.mrb[0].mxu0
        %v1459 = vadd.f32 0.0, %v1458
        %v1460 = vpop.f32.mrb[0].mxu0
        %1461 = vdwg.mxu0
        %v1462 = vsel %vm968, %v1027, 0
        %1464 = vmatprep.subr.mxu0 0.0
        %1465 = vmatpush1.msra.mxu0 %v278
        %1466 = vmatprep.subr.mxu0 0.0
        %1467 = vmatpush1.msra.mxu0 0.0
        %1468 = vmatprep.subr.mxu0 0.0
        %1469 = vmatpush1.msra.mxu0 0.0
        %1470 = vmatprep.subr.mxu0 0.0
        %1471 = vmatpush1.msra.mxu0 0.0
        %1472 = vmatprep.subr.mxu0 0.0
        %1473 = vmatpush1.msra.mxu0 0.0
        %1474 = vmatprep.subr.mxu0 0.0
        %1475 = vmatpush1.msra.mxu0 0.0
        %1476 = vmatprep.subr.mxu0 0.0
        %1477 = vmatpush1.msra.mxu0 0.0
        %1478 = vmatprep.subr.mxu0 0.0
        %1479 = vmatpush1.msra.mxu0 0.0
        %1480 = vmatprep.subr.mxu0 0.0
        %1481 = vmatpush1.msra.mxu0 0.0
        %1482 = vmatprep.subr.mxu0 0.0
        %1483 = vmatpush1.msra.mxu0 0.0
        %1484 = vmatprep.subr.mxu0 0.0
        %1485 = vmatpush1.msra.mxu0 0.0
        %1486 = vmatprep.subr.mxu0 0.0
        %1487 = vmatpush1.msra.mxu0 0.0
        %1488 = vmatprep.subr.mxu0 0.0
        %1489 = vmatpush1.msra.mxu0 0.0
        %1490 = vmatprep.subr.mxu0 0.0
        %1491 = vmatpush1.msra.mxu0 0.0
        %1492 = vmatprep.subr.mxu0 0.0
        %1493 = vmatpush1.msra.mxu0 0.0
        %1494 = vmatprep.subr.mxu0 0.0
        %1495 = vmatpush1.msra.mxu0 0.0
        %1496 = vmatprep.subr.mxu0 0.0
        %1497 = vmatpush1.msra.mxu0 0.0
        %1498 = vmatprep.subr.mxu0 0.0
        %1499 = vmatpush1.msra.mxu0 0.0
        %1500 = vmatprep.subr.mxu0 0.0
        %1501 = vmatpush1.msra.mxu0 0.0
        %1502 = vmatprep.subr.mxu0 0.0
        %1503 = vmatpush1.msra.mxu0 0.0
        %1504 = vmatprep.subr.mxu0 0.0
        %1505 = vmatpush1.msra.mxu0 0.0
        %1506 = vmatprep.subr.mxu0 0.0
        %1507 = vmatpush1.msra.mxu0 0.0
        %1508 = vmatprep.subr.mxu0 0.0
        %1509 = vmatpush1.msra.mxu0 0.0
        %1510 = vmatprep.subr.mxu0 0.0
        %1511 = vmatpush1.msra.mxu0 0.0
        %1512 = vmatprep.subr.mxu0 0.0
        %1513 = vmatpush1.msra.mxu0 0.0
        %1514 = vmatprep.subr.mxu0 0.0
        %1515 = vmatpush1.msra.mxu0 0.0
        %1516 = vmatprep.subr.mxu0 0.0
        %1517 = vmatpush1.msra.mxu0 0.0
        %1518 = vmatprep.subr.mxu0 0.0
        %1519 = vmatpush1.msra.mxu0 0.0
        %1520 = vmatprep.subr.mxu0 0.0
        %1521 = vmatpush1.msra.mxu0 0.0
        %1522 = vmatprep.subr.mxu0 0.0
        %1523 = vmatpush1.msra.mxu0 0.0
        %1524 = vmatprep.subr.mxu0 0.0
        %1525 = vmatpush1.msra.mxu0 0.0
        %1526 = vmatprep.subr.mxu0 0.0
        %1527 = vmatpush1.msra.mxu0 0.0
        %1528 = vmatprep.mubr.f32.mxu0 0.0
        %1529 = vmatmul.mubr.f32.gmra.mrb[0].mxu0 %v1462
        %v1530 = vpop.f32.mrb[0].mxu0
        %v1531 = vadd.f32 0.0, %v1530
        %v1532 = vpop.f32.mrb[0].mxu0
        %1533 = vdwg.mxu0
        %v1534 = vsel %vm968, %v1029, 0
        %1536 = vmatprep.subr.mxu0 0.0
        %1537 = vmatpush1.msra.mxu0 %v279
        %1538 = vmatprep.subr.mxu0 0.0
        %1539 = vmatpush1.msra.mxu0 0.0
        %1540 = vmatprep.subr.mxu0 0.0
        %1541 = vmatpush1.msra.mxu0 0.0
        %1542 = vmatprep.subr.mxu0 0.0
        %1543 = vmatpush1.msra.mxu0 0.0
        %1544 = vmatprep.subr.mxu0 0.0
        %1545 = vmatpush1.msra.mxu0 0.0
        %1546 = vmatprep.subr.mxu0 0.0
        %1547 = vmatpush1.msra.mxu0 0.0
        %1548 = vmatprep.subr.mxu0 0.0
        %1549 = vmatpush1.msra.mxu0 0.0
        %1550 = vmatprep.subr.mxu0 0.0
        %1551 = vmatpush1.msra.mxu0 0.0
        %1552 = vmatprep.subr.mxu0 0.0
        %1553 = vmatpush1.msra.mxu0 0.0
        %1554 = vmatprep.subr.mxu0 0.0
        %1555 = vmatpush1.msra.mxu0 0.0
        %1556 = vmatprep.subr.mxu0 0.0
        %1557 = vmatpush1.msra.mxu0 0.0
        %1558 = vmatprep.subr.mxu0 0.0
        %1559 = vmatpush1.msra.mxu0 0.0
        %1560 = vmatprep.subr.mxu0 0.0
        %1561 = vmatpush1.msra.mxu0 0.0
        %1562 = vmatprep.subr.mxu0 0.0
        %1563 = vmatpush1.msra.mxu0 0.0
        %1564 = vmatprep.subr.mxu0 0.0
        %1565 = vmatpush1.msra.mxu0 0.0
        %1566 = vmatprep.subr.mxu0 0.0
        %1567 = vmatpush1.msra.mxu0 0.0
        %1568 = vmatprep.subr.mxu0 0.0
        %1569 = vmatpush1.msra.mxu0 0.0
        %1570 = vmatprep.subr.mxu0 0.0
        %1571 = vmatpush1.msra.mxu0 0.0
        %1572 = vmatprep.subr.mxu0 0.0
        %1573 = vmatpush1.msra.mxu0 0.0
        %1574 = vmatprep.subr.mxu0 0.0
        %1575 = vmatpush1.msra.mxu0 0.0
        %1576 = vmatprep.subr.mxu0 0.0
        %1577 = vmatpush1.msra.mxu0 0.0
        %1578 = vmatprep.subr.mxu0 0.0
        %1579 = vmatpush1.msra.mxu0 0.0
        %1580 = vmatprep.subr.mxu0 0.0
        %1581 = vmatpush1.msra.mxu0 0.0
        %1582 = vmatprep.subr.mxu0 0.0
        %1583 = vmatpush1.msra.mxu0 0.0
        %1584 = vmatprep.subr.mxu0 0.0
        %1585 = vmatpush1.msra.mxu0 0.0
        %1586 = vmatprep.subr.mxu0 0.0
        %1587 = vmatpush1.msra.mxu0 0.0
        %1588 = vmatprep.subr.mxu0 0.0
        %1589 = vmatpush1.msra.mxu0 0.0
        %1590 = vmatprep.subr.mxu0 0.0
        %1591 = vmatpush1.msra.mxu0 0.0
        %1592 = vmatprep.subr.mxu0 0.0
        %1593 = vmatpush1.msra.mxu0 0.0
        %1594 = vmatprep.subr.mxu0 0.0
        %1595 = vmatpush1.msra.mxu0 0.0
        %1596 = vmatprep.subr.mxu0 0.0
        %1597 = vmatpush1.msra.mxu0 0.0
        %1598 = vmatprep.subr.mxu0 0.0
        %1599 = vmatpush1.msra.mxu0 0.0
        %1600 = vmatprep.mubr.f32.mxu0 0.0
        %1601 = vmatmul.mubr.f32.gmra.mrb[0].mxu0 %v1534
        %v1602 = vpop.f32.mrb[0].mxu0
        %v1603 = vadd.f32 0.0, %v1602
        %v1604 = vpop.f32.mrb[0].mxu0
        %1605 = vdwg.mxu0
        %v1606 = vsel %vm336, %v271, 0
        %1608 = vmatprep.subr.mxu0 0.0
        %1609 = vmatpush1.msra.mxu0 %v282
        %1610 = vmatprep.subr.mxu0 0.0
        %1611 = vmatpush1.msra.mxu0 %v283
        %1612 = vmatprep.subr.mxu0 0.0
        %1613 = vmatpush1.msra.mxu0 %v284
        %1614 = vmatprep.subr.mxu0 0.0
        %1615 = vmatpush1.msra.mxu0 %v285
        %1616 = vmatprep.subr.mxu0 0.0
        %1617 = vmatpush1.msra.mxu0 0.0
        %1618 = vmatprep.subr.mxu0 0.0
        %1619 = vmatpush1.msra.mxu0 0.0
        %1620 = vmatprep.subr.mxu0 0.0
        %1621 = vmatpush1.msra.mxu0 0.0
        %1622 = vmatprep.subr.mxu0 0.0
        %1623 = vmatpush1.msra.mxu0 0.0
        %1624 = vmatprep.subr.mxu0 0.0
        %1625 = vmatpush1.msra.mxu0 0.0
        %1626 = vmatprep.subr.mxu0 0.0
        %1627 = vmatpush1.msra.mxu0 0.0
        %1628 = vmatprep.subr.mxu0 0.0
        %1629 = vmatpush1.msra.mxu0 0.0
        %1630 = vmatprep.subr.mxu0 0.0
        %1631 = vmatpush1.msra.mxu0 0.0
        %1632 = vmatprep.subr.mxu0 0.0
        %1633 = vmatpush1.msra.mxu0 0.0
        %1634 = vmatprep.subr.mxu0 0.0
        %1635 = vmatpush1.msra.mxu0 0.0
        %1636 = vmatprep.subr.mxu0 0.0
        %1637 = vmatpush1.msra.mxu0 0.0
        %1638 = vmatprep.subr.mxu0 0.0
        %1639 = vmatpush1.msra.mxu0 0.0
        %1640 = vmatprep.subr.mxu0 0.0
        %1641 = vmatpush1.msra.mxu0 0.0
        %1642 = vmatprep.subr.mxu0 0.0
        %1643 = vmatpush1.msra.mxu0 0.0
        %1644 = vmatprep.subr.mxu0 0.0
        %1645 = vmatpush1.msra.mxu0 0.0
        %1646 = vmatprep.subr.mxu0 0.0
        %1647 = vmatpush1.msra.mxu0 0.0
        %1648 = vmatprep.subr.mxu0 0.0
        %1649 = vmatpush1.msra.mxu0 0.0
        %1650 = vmatprep.subr.mxu0 0.0
        %1651 = vmatpush1.msra.mxu0 0.0
        %1652 = vmatprep.subr.mxu0 0.0
        %1653 = vmatpush1.msra.mxu0 0.0
        %1654 = vmatprep.subr.mxu0 0.0
        %1655 = vmatpush1.msra.mxu0 0.0
        %1656 = vmatprep.subr.mxu0 0.0
        %1657 = vmatpush1.msra.mxu0 0.0
        %1658 = vmatprep.subr.mxu0 0.0
        %1659 = vmatpush1.msra.mxu0 0.0
        %1660 = vmatprep.subr.mxu0 0.0
        %1661 = vmatpush1.msra.mxu0 0.0
        %1662 = vmatprep.subr.mxu0 0.0
        %1663 = vmatpush1.msra.mxu0 0.0
        %1664 = vmatprep.subr.mxu0 0.0
        %1665 = vmatpush1.msra.mxu0 0.0
        %1666 = vmatprep.subr.mxu0 0.0
        %1667 = vmatpush1.msra.mxu0 0.0
        %1668 = vmatprep.subr.mxu0 0.0
        %1669 = vmatpush1.msra.mxu0 0.0
        %1670 = vmatprep.subr.mxu0 0.0
        %1671 = vmatpush1.msra.mxu0 0.0
        %1672 = vmatprep.mubr.f32.mxu0 0.0
        %1673 = vmatmul.mubr.f32.gmra.mrb[0].mxu0 %v1606
        %v1674 = vpop.f32.mrb[0].mxu0
        %v1675 = vadd.f32 0.0, %v1674
        %v1676 = vpop.f32.mrb[0].mxu0
        %1677 = vdwg.mxu0
        %v1679 = vrot.slane %v1675, 1
        %v1680 = vrot.slane %v1675, 2
        %v1681 = vrot.slane %v1675, 3
        %v1682 = vrot.slane %v1675, 4
        %v1683 = vrot.slane %v1675, 5
        %v1684 = vrot.slane %v1675, 6
        %v1685 = vrot.slane %v1675, 7
        %v1694 = vadd.f32 %v1099, %v1675
        %v1695 = vadd.f32 %v1171, %v1679
        %v1696 = vadd.f32 %v1243, %v1680
        %v1697 = vadd.f32 %v1315, %v1681
        %v1698 = vadd.f32 %v1387, %v1682
        %v1699 = vadd.f32 %v1459, %v1683
        %v1700 = vadd.f32 %v1531, %v1684
        %v1701 = vadd.f32 %v1603, %v1685
        %v1703 = vsel %vm336, %v1694, 0
        %1705 = vmatprep.subr.mxu0 0.0
        %1706 = vmatpush1.xpose.msra.mxu0 %v340
        %1707 = vmatprep.subr.mxu0 0.0
        %1708 = vmatpush1.xpose.msra.mxu0 0.0
        %1709 = vmatprep.subr.mxu0 0.0
        %1710 = vmatpush1.xpose.msra.mxu0 0.0
        %1711 = vmatprep.subr.mxu0 0.0
        %1712 = vmatpush1.xpose.msra.mxu0 0.0
        %1713 = vmatprep.subr.mxu0 0.0
        %1714 = vmatpush1.xpose.msra.mxu0 0.0
        %1715 = vmatprep.subr.mxu0 0.0
        %1716 = vmatpush1.xpose.msra.mxu0 0.0
        %1717 = vmatprep.subr.mxu0 0.0
        %1718 = vmatpush1.xpose.msra.mxu0 0.0
        %1719 = vmatprep.subr.mxu0 0.0
        %1720 = vmatpush1.xpose.msra.mxu0 0.0
        %1721 = vmatprep.subr.mxu0 0.0
        %1722 = vmatpush1.xpose.msra.mxu0 0.0
        %1723 = vmatprep.subr.mxu0 0.0
        %1724 = vmatpush1.xpose.msra.mxu0 0.0
        %1725 = vmatprep.subr.mxu0 0.0
        %1726 = vmatpush1.xpose.msra.mxu0 0.0
        %1727 = vmatprep.subr.mxu0 0.0
        %1728 = vmatpush1.xpose.msra.mxu0 0.0
        %1729 = vmatprep.subr.mxu0 0.0
        %1730 = vmatpush1.xpose.msra.mxu0 0.0
        %1731 = vmatprep.subr.mxu0 0.0
        %1732 = vmatpush1.xpose.msra.mxu0 0.0
        %1733 = vmatprep.subr.mxu0 0.0
        %1734 = vmatpush1.xpose.msra.mxu0 0.0
        %1735 = vmatprep.subr.mxu0 0.0
        %1736 = vmatpush1.xpose.msra.mxu0 0.0
        %1737 = vmatprep.subr.mxu0 0.0
        %1738 = vmatpush1.xpose.msra.mxu0 0.0
        %1739 = vmatprep.subr.mxu0 0.0
        %1740 = vmatpush1.xpose.msra.mxu0 0.0
        %1741 = vmatprep.subr.mxu0 0.0
        %1742 = vmatpush1.xpose.msra.mxu0 0.0
        %1743 = vmatprep.subr.mxu0 0.0
        %1744 = vmatpush1.xpose.msra.mxu0 0.0
        %1745 = vmatprep.subr.mxu0 0.0
        %1746 = vmatpush1.xpose.msra.mxu0 0.0
        %1747 = vmatprep.subr.mxu0 0.0
        %1748 = vmatpush1.xpose.msra.mxu0 0.0
        %1749 = vmatprep.subr.mxu0 0.0
        %1750 = vmatpush1.xpose.msra.mxu0 0.0
        %1751 = vmatprep.subr.mxu0 0.0
        %1752 = vmatpush1.xpose.msra.mxu0 0.0
        %1753 = vmatprep.subr.mxu0 0.0
        %1754 = vmatpush1.xpose.msra.mxu0 0.0
        %1755 = vmatprep.subr.mxu0 0.0
        %1756 = vmatpush1.xpose.msra.mxu0 0.0
        %1757 = vmatprep.subr.mxu0 0.0
        %1758 = vmatpush1.xpose.msra.mxu0 0.0
        %1759 = vmatprep.subr.mxu0 0.0
        %1760 = vmatpush1.xpose.msra.mxu0 0.0
        %1761 = vmatprep.subr.mxu0 0.0
        %1762 = vmatpush1.xpose.msra.mxu0 0.0
        %1763 = vmatprep.subr.mxu0 0.0
        %1764 = vmatpush1.xpose.msra.mxu0 0.0
        %1765 = vmatprep.subr.mxu0 0.0
        %1766 = vmatpush1.xpose.msra.mxu0 0.0
        %1767 = vmatprep.subr.mxu0 0.0
        %1768 = vmatpush1.xpose.msra.mxu0 0.0
        %1769 = vmatprep.mubr.f32.mxu0 0.0
        %1770 = vmatmul.mubr.f32.gmra.mrb[0].mxu0 %v1703
        %v1771 = vpop.f32.mrb[0].mxu0
        %v1772 = vadd.f32 0.0, %v1771
        %v1773 = vpop.f32.mrb[0].mxu0
        %1774 = vdwg.mxu0
        %v1776 = vsel %vm336, %v1695, 0
        %1778 = vmatprep.subr.mxu0 0.0
        %1779 = vmatpush1.xpose.msra.mxu0 %v415
        %1780 = vmatprep.subr.mxu0 0.0
        %1781 = vmatpush1.xpose.msra.mxu0 0.0
        %1782 = vmatprep.subr.mxu0 0.0
        %1783 = vmatpush1.xpose.msra.mxu0 0.0
        %1784 = vmatprep.subr.mxu0 0.0
        %1785 = vmatpush1.xpose.msra.mxu0 0.0
        %1786 = vmatprep.subr.mxu0 0.0
        %1787 = vmatpush1.xpose.msra.mxu0 0.0
        %1788 = vmatprep.subr.mxu0 0.0
        %1789 = vmatpush1.xpose.msra.mxu0 0.0
        %1790 = vmatprep.subr.mxu0 0.0
        %1791 = vmatpush1.xpose.msra.mxu0 0.0
        %1792 = vmatprep.subr.mxu0 0.0
        %1793 = vmatpush1.xpose.msra.mxu0 0.0
        %1794 = vmatprep.subr.mxu0 0.0
        %1795 = vmatpush1.xpose.msra.mxu0 0.0
        %1796 = vmatprep.subr.mxu0 0.0
        %1797 = vmatpush1.xpose.msra.mxu0 0.0
        %1798 = vmatprep.subr.mxu0 0.0
        %1799 = vmatpush1.xpose.msra.mxu0 0.0
        %1800 = vmatprep.subr.mxu0 0.0
        %1801 = vmatpush1.xpose.msra.mxu0 0.0
        %1802 = vmatprep.subr.mxu0 0.0
        %1803 = vmatpush1.xpose.msra.mxu0 0.0
        %1804 = vmatprep.subr.mxu0 0.0
        %1805 = vmatpush1.xpose.msra.mxu0 0.0
        %1806 = vmatprep.subr.mxu0 0.0
        %1807 = vmatpush1.xpose.msra.mxu0 0.0
        %1808 = vmatprep.subr.mxu0 0.0
        %1809 = vmatpush1.xpose.msra.mxu0 0.0
        %1810 = vmatprep.subr.mxu0 0.0
        %1811 = vmatpush1.xpose.msra.mxu0 0.0
        %1812 = vmatprep.subr.mxu0 0.0
        %1813 = vmatpush1.xpose.msra.mxu0 0.0
        %1814 = vmatprep.subr.mxu0 0.0
        %1815 = vmatpush1.xpose.msra.mxu0 0.0
        %1816 = vmatprep.subr.mxu0 0.0
        %1817 = vmatpush1.xpose.msra.mxu0 0.0
        %1818 = vmatprep.subr.mxu0 0.0
        %1819 = vmatpush1.xpose.msra.mxu0 0.0
        %1820 = vmatprep.subr.mxu0 0.0
        %1821 = vmatpush1.xpose.msra.mxu0 0.0
        %1822 = vmatprep.subr.mxu0 0.0
        %1823 = vmatpush1.xpose.msra.mxu0 0.0
        %1824 = vmatprep.subr.mxu0 0.0
        %1825 = vmatpush1.xpose.msra.mxu0 0.0
        %1826 = vmatprep.subr.mxu0 0.0
        %1827 = vmatpush1.xpose.msra.mxu0 0.0
        %1828 = vmatprep.subr.mxu0 0.0
        %1829 = vmatpush1.xpose.msra.mxu0 0.0
        %1830 = vmatprep.subr.mxu0 0.0
        %1831 = vmatpush1.xpose.msra.mxu0 0.0
        %1832 = vmatprep.subr.mxu0 0.0
        %1833 = vmatpush1.xpose.msra.mxu0 0.0
        %1834 = vmatprep.subr.mxu0 0.0
        %1835 = vmatpush1.xpose.msra.mxu0 0.0
        %1836 = vmatprep.subr.mxu0 0.0
        %1837 = vmatpush1.xpose.msra.mxu0 0.0
        %1838 = vmatprep.subr.mxu0 0.0
        %1839 = vmatpush1.xpose.msra.mxu0 0.0
        %1840 = vmatprep.subr.mxu0 0.0
        %1841 = vmatpush1.xpose.msra.mxu0 0.0
        %1842 = vmatprep.mubr.f32.mxu0 0.0
        %1843 = vmatmul.mubr.f32.gmra.mrb[0].mxu0 %v1776
        %v1844 = vpop.f32.mrb[0].mxu0
        %v1845 = vadd.f32 0.0, %v1844
        %v1846 = vpop.f32.mrb[0].mxu0
        %1847 = vdwg.mxu0
        %v1849 = vsel %vm336, %v1696, 0
        %1851 = vmatprep.subr.mxu0 0.0
        %1852 = vmatpush1.xpose.msra.mxu0 %v490
        %1853 = vmatprep.subr.mxu0 0.0
        %1854 = vmatpush1.xpose.msra.mxu0 0.0
        %1855 = vmatprep.subr.mxu0 0.0
        %1856 = vmatpush1.xpose.msra.mxu0 0.0
        %1857 = vmatprep.subr.mxu0 0.0
        %1858 = vmatpush1.xpose.msra.mxu0 0.0
        %1859 = vmatprep.subr.mxu0 0.0
        %1860 = vmatpush1.xpose.msra.mxu0 0.0
        %1861 = vmatprep.subr.mxu0 0.0
        %1862 = vmatpush1.xpose.msra.mxu0 0.0
        %1863 = vmatprep.subr.mxu0 0.0
        %1864 = vmatpush1.xpose.msra.mxu0 0.0
        %1865 = vmatprep.subr.mxu0 0.0
        %1866 = vmatpush1.xpose.msra.mxu0 0.0
        %1867 = vmatprep.subr.mxu0 0.0
        %1868 = vmatpush1.xpose.msra.mxu0 0.0
        %1869 = vmatprep.subr.mxu0 0.0
        %1870 = vmatpush1.xpose.msra.mxu0 0.0
        %1871 = vmatprep.subr.mxu0 0.0
        %1872 = vmatpush1.xpose.msra.mxu0 0.0
        %1873 = vmatprep.subr.mxu0 0.0
        %1874 = vmatpush1.xpose.msra.mxu0 0.0
        %1875 = vmatprep.subr.mxu0 0.0
        %1876 = vmatpush1.xpose.msra.mxu0 0.0
        %1877 = vmatprep.subr.mxu0 0.0
        %1878 = vmatpush1.xpose.msra.mxu0 0.0
        %1879 = vmatprep.subr.mxu0 0.0
        %1880 = vmatpush1.xpose.msra.mxu0 0.0
        %1881 = vmatprep.subr.mxu0 0.0
        %1882 = vmatpush1.xpose.msra.mxu0 0.0
        %1883 = vmatprep.subr.mxu0 0.0
        %1884 = vmatpush1.xpose.msra.mxu0 0.0
        %1885 = vmatprep.subr.mxu0 0.0
        %1886 = vmatpush1.xpose.msra.mxu0 0.0
        %1887 = vmatprep.subr.mxu0 0.0
        %1888 = vmatpush1.xpose.msra.mxu0 0.0
        %1889 = vmatprep.subr.mxu0 0.0
        %1890 = vmatpush1.xpose.msra.mxu0 0.0
        %1891 = vmatprep.subr.mxu0 0.0
        %1892 = vmatpush1.xpose.msra.mxu0 0.0
        %1893 = vmatprep.subr.mxu0 0.0
        %1894 = vmatpush1.xpose.msra.mxu0 0.0
        %1895 = vmatprep.subr.mxu0 0.0
        %1896 = vmatpush1.xpose.msra.mxu0 0.0
        %1897 = vmatprep.subr.mxu0 0.0
        %1898 = vmatpush1.xpose.msra.mxu0 0.0
        %1899 = vmatprep.subr.mxu0 0.0
        %1900 = vmatpush1.xpose.msra.mxu0 0.0
        %1901 = vmatprep.subr.mxu0 0.0
        %1902 = vmatpush1.xpose.msra.mxu0 0.0
        %1903 = vmatprep.subr.mxu0 0.0
        %1904 = vmatpush1.xpose.msra.mxu0 0.0
        %1905 = vmatprep.subr.mxu0 0.0
        %1906 = vmatpush1.xpose.msra.mxu0 0.0
        %1907 = vmatprep.subr.mxu0 0.0
        %1908 = vmatpush1.xpose.msra.mxu0 0.0
        %1909 = vmatprep.subr.mxu0 0.0
        %1910 = vmatpush1.xpose.msra.mxu0 0.0
        %1911 = vmatprep.subr.mxu0 0.0
        %1912 = vmatpush1.xpose.msra.mxu0 0.0
        %1913 = vmatprep.subr.mxu0 0.0
        %1914 = vmatpush1.xpose.msra.mxu0 0.0
        %1915 = vmatprep.mubr.f32.mxu0 0.0
        %1916 = vmatmul.mubr.f32.gmra.mrb[0].mxu0 %v1849
        %v1917 = vpop.f32.mrb[0].mxu0
        %v1918 = vadd.f32 0.0, %v1917
        %v1919 = vpop.f32.mrb[0].mxu0
        %1920 = vdwg.mxu0
        %v1922 = vsel %vm336, %v1697, 0
        %1924 = vmatprep.subr.mxu0 0.0
        %1925 = vmatpush1.xpose.msra.mxu0 %v565
        %1926 = vmatprep.subr.mxu0 0.0
        %1927 = vmatpush1.xpose.msra.mxu0 0.0
        %1928 = vmatprep.subr.mxu0 0.0
        %1929 = vmatpush1.xpose.msra.mxu0 0.0
        %1930 = vmatprep.subr.mxu0 0.0
        %1931 = vmatpush1.xpose.msra.mxu0 0.0
        %1932 = vmatprep.subr.mxu0 0.0
        %1933 = vmatpush1.xpose.msra.mxu0 0.0
        %1934 = vmatprep.subr.mxu0 0.0
        %1935 = vmatpush1.xpose.msra.mxu0 0.0
        %1936 = vmatprep.subr.mxu0 0.0
        %1937 = vmatpush1.xpose.msra.mxu0 0.0
        %1938 = vmatprep.subr.mxu0 0.0
        %1939 = vmatpush1.xpose.msra.mxu0 0.0
        %1940 = vmatprep.subr.mxu0 0.0
        %1941 = vmatpush1.xpose.msra.mxu0 0.0
        %1942 = vmatprep.subr.mxu0 0.0
        %1943 = vmatpush1.xpose.msra.mxu0 0.0
        %1944 = vmatprep.subr.mxu0 0.0
        %1945 = vmatpush1.xpose.msra.mxu0 0.0
        %1946 = vmatprep.subr.mxu0 0.0
        %1947 = vmatpush1.xpose.msra.mxu0 0.0
        %1948 = vmatprep.subr.mxu0 0.0
        %1949 = vmatpush1.xpose.msra.mxu0 0.0
        %1950 = vmatprep.subr.mxu0 0.0
        %1951 = vmatpush1.xpose.msra.mxu0 0.0
        %1952 = vmatprep.subr.mxu0 0.0
        %1953 = vmatpush1.xpose.msra.mxu0 0.0
        %1954 = vmatprep.subr.mxu0 0.0
        %1955 = vmatpush1.xpose.msra.mxu0 0.0
        %1956 = vmatprep.subr.mxu0 0.0
        %1957 = vmatpush1.xpose.msra.mxu0 0.0
        %1958 = vmatprep.subr.mxu0 0.0
        %1959 = vmatpush1.xpose.msra.mxu0 0.0
        %1960 = vmatprep.subr.mxu0 0.0
        %1961 = vmatpush1.xpose.msra.mxu0 0.0
        %1962 = vmatprep.subr.mxu0 0.0
        %1963 = vmatpush1.xpose.msra.mxu0 0.0
        %1964 = vmatprep.subr.mxu0 0.0
        %1965 = vmatpush1.xpose.msra.mxu0 0.0
        %1966 = vmatprep.subr.mxu0 0.0
        %1967 = vmatpush1.xpose.msra.mxu0 0.0
        %1968 = vmatprep.subr.mxu0 0.0
        %1969 = vmatpush1.xpose.msra.mxu0 0.0
        %1970 = vmatprep.subr.mxu0 0.0
        %1971 = vmatpush1.xpose.msra.mxu0 0.0
        %1972 = vmatprep.subr.mxu0 0.0
        %1973 = vmatpush1.xpose.msra.mxu0 0.0
        %1974 = vmatprep.subr.mxu0 0.0
        %1975 = vmatpush1.xpose.msra.mxu0 0.0
        %1976 = vmatprep.subr.mxu0 0.0
        %1977 = vmatpush1.xpose.msra.mxu0 0.0
        %1978 = vmatprep.subr.mxu0 0.0
        %1979 = vmatpush1.xpose.msra.mxu0 0.0
        %1980 = vmatprep.subr.mxu0 0.0
        %1981 = vmatpush1.xpose.msra.mxu0 0.0
        %1982 = vmatprep.subr.mxu0 0.0
        %1983 = vmatpush1.xpose.msra.mxu0 0.0
        %1984 = vmatprep.subr.mxu0 0.0
        %1985 = vmatpush1.xpose.msra.mxu0 0.0
        %1986 = vmatprep.subr.mxu0 0.0
        %1987 = vmatpush1.xpose.msra.mxu0 0.0
        %1988 = vmatprep.mubr.f32.mxu0 0.0
        %1989 = vmatmul.mubr.f32.gmra.mrb[0].mxu0 %v1922
        %v1990 = vpop.f32.mrb[0].mxu0
        %v1991 = vadd.f32 0.0, %v1990
        %v1992 = vpop.f32.mrb[0].mxu0
        %1993 = vdwg.mxu0
        %v1995 = vsel %vm336, %v1698, 0
        %1997 = vmatprep.subr.mxu0 0.0
        %1998 = vmatpush1.xpose.msra.mxu0 %v640
        %1999 = vmatprep.subr.mxu0 0.0
        %2000 = vmatpush1.xpose.msra.mxu0 0.0
        %2001 = vmatprep.subr.mxu0 0.0
        %2002 = vmatpush1.xpose.msra.mxu0 0.0
        %2003 = vmatprep.subr.mxu0 0.0
        %2004 = vmatpush1.xpose.msra.mxu0 0.0
        %2005 = vmatprep.subr.mxu0 0.0
        %2006 = vmatpush1.xpose.msra.mxu0 0.0
        %2007 = vmatprep.subr.mxu0 0.0
        %2008 = vmatpush1.xpose.msra.mxu0 0.0
        %2009 = vmatprep.subr.mxu0 0.0
        %2010 = vmatpush1.xpose.msra.mxu0 0.0
        %2011 = vmatprep.subr.mxu0 0.0
        %2012 = vmatpush1.xpose.msra.mxu0 0.0
        %2013 = vmatprep.subr.mxu0 0.0
        %2014 = vmatpush1.xpose.msra.mxu0 0.0
        %2015 = vmatprep.subr.mxu0 0.0
        %2016 = vmatpush1.xpose.msra.mxu0 0.0
        %2017 = vmatprep.subr.mxu0 0.0
        %2018 = vmatpush1.xpose.msra.mxu0 0.0
        %2019 = vmatprep.subr.mxu0 0.0
        %2020 = vmatpush1.xpose.msra.mxu0 0.0
        %2021 = vmatprep.subr.mxu0 0.0
        %2022 = vmatpush1.xpose.msra.mxu0 0.0
        %2023 = vmatprep.subr.mxu0 0.0
        %2024 = vmatpush1.xpose.msra.mxu0 0.0
        %2025 = vmatprep.subr.mxu0 0.0
        %2026 = vmatpush1.xpose.msra.mxu0 0.0
        %2027 = vmatprep.subr.mxu0 0.0
        %2028 = vmatpush1.xpose.msra.mxu0 0.0
        %2029 = vmatprep.subr.mxu0 0.0
        %2030 = vmatpush1.xpose.msra.mxu0 0.0
        %2031 = vmatprep.subr.mxu0 0.0
        %2032 = vmatpush1.xpose.msra.mxu0 0.0
        %2033 = vmatprep.subr.mxu0 0.0
        %2034 = vmatpush1.xpose.msra.mxu0 0.0
        %2035 = vmatprep.subr.mxu0 0.0
        %2036 = vmatpush1.xpose.msra.mxu0 0.0
        %2037 = vmatprep.subr.mxu0 0.0
        %2038 = vmatpush1.xpose.msra.mxu0 0.0
        %2039 = vmatprep.subr.mxu0 0.0
        %2040 = vmatpush1.xpose.msra.mxu0 0.0
        %2041 = vmatprep.subr.mxu0 0.0
        %2042 = vmatpush1.xpose.msra.mxu0 0.0
        %2043 = vmatprep.subr.mxu0 0.0
        %2044 = vmatpush1.xpose.msra.mxu0 0.0
        %2045 = vmatprep.subr.mxu0 0.0
        %2046 = vmatpush1.xpose.msra.mxu0 0.0
        %2047 = vmatprep.subr.mxu0 0.0
        %2048 = vmatpush1.xpose.msra.mxu0 0.0
        %2049 = vmatprep.subr.mxu0 0.0
        %2050 = vmatpush1.xpose.msra.mxu0 0.0
        %2051 = vmatprep.subr.mxu0 0.0
        %2052 = vmatpush1.xpose.msra.mxu0 0.0
        %2053 = vmatprep.subr.mxu0 0.0
        %2054 = vmatpush1.xpose.msra.mxu0 0.0
        %2055 = vmatprep.subr.mxu0 0.0
        %2056 = vmatpush1.xpose.msra.mxu0 0.0
        %2057 = vmatprep.subr.mxu0 0.0
        %2058 = vmatpush1.xpose.msra.mxu0 0.0
        %2059 = vmatprep.subr.mxu0 0.0
        %2060 = vmatpush1.xpose.msra.mxu0 0.0
        %2061 = vmatprep.mubr.f32.mxu0 0.0
        %2062 = vmatmul.mubr.f32.gmra.mrb[0].mxu0 %v1995
        %v2063 = vpop.f32.mrb[0].mxu0
        %v2064 = vadd.f32 0.0, %v2063
        %v2065 = vpop.f32.mrb[0].mxu0
        %2066 = vdwg.mxu0
        %v2068 = vsel %vm336, %v1699, 0
        %2070 = vmatprep.subr.mxu0 0.0
        %2071 = vmatpush1.xpose.msra.mxu0 %v715
        %2072 = vmatprep.subr.mxu0 0.0
        %2073 = vmatpush1.xpose.msra.mxu0 0.0
        %2074 = vmatprep.subr.mxu0 0.0
        %2075 = vmatpush1.xpose.msra.mxu0 0.0
        %2076 = vmatprep.subr.mxu0 0.0
        %2077 = vmatpush1.xpose.msra.mxu0 0.0
        %2078 = vmatprep.subr.mxu0 0.0
        %2079 = vmatpush1.xpose.msra.mxu0 0.0
        %2080 = vmatprep.subr.mxu0 0.0
        %2081 = vmatpush1.xpose.msra.mxu0 0.0
        %2082 = vmatprep.subr.mxu0 0.0
        %2083 = vmatpush1.xpose.msra.mxu0 0.0
        %2084 = vmatprep.subr.mxu0 0.0
        %2085 = vmatpush1.xpose.msra.mxu0 0.0
        %2086 = vmatprep.subr.mxu0 0.0
        %2087 = vmatpush1.xpose.msra.mxu0 0.0
        %2088 = vmatprep.subr.mxu0 0.0
        %2089 = vmatpush1.xpose.msra.mxu0 0.0
        %2090 = vmatprep.subr.mxu0 0.0
        %2091 = vmatpush1.xpose.msra.mxu0 0.0
        %2092 = vmatprep.subr.mxu0 0.0
        %2093 = vmatpush1.xpose.msra.mxu0 0.0
        %2094 = vmatprep.subr.mxu0 0.0
        %2095 = vmatpush1.xpose.msra.mxu0 0.0
        %2096 = vmatprep.subr.mxu0 0.0
        %2097 = vmatpush1.xpose.msra.mxu0 0.0
        %2098 = vmatprep.subr.mxu0 0.0
        %2099 = vmatpush1.xpose.msra.mxu0 0.0
        %2100 = vmatprep.subr.mxu0 0.0
        %2101 = vmatpush1.xpose.msra.mxu0 0.0
        %2102 = vmatprep.subr.mxu0 0.0
        %2103 = vmatpush1.xpose.msra.mxu0 0.0
        %2104 = vmatprep.subr.mxu0 0.0
        %2105 = vmatpush1.xpose.msra.mxu0 0.0
        %2106 = vmatprep.subr.mxu0 0.0
        %2107 = vmatpush1.xpose.msra.mxu0 0.0
        %2108 = vmatprep.subr.mxu0 0.0
        %2109 = vmatpush1.xpose.msra.mxu0 0.0
        %2110 = vmatprep.subr.mxu0 0.0
        %2111 = vmatpush1.xpose.msra.mxu0 0.0
        %2112 = vmatprep.subr.mxu0 0.0
        %2113 = vmatpush1.xpose.msra.mxu0 0.0
        %2114 = vmatprep.subr.mxu0 0.0
        %2115 = vmatpush1.xpose.msra.mxu0 0.0
        %2116 = vmatprep.subr.mxu0 0.0
        %2117 = vmatpush1.xpose.msra.mxu0 0.0
        %2118 = vmatprep.subr.mxu0 0.0
        %2119 = vmatpush1.xpose.msra.mxu0 0.0
        %2120 = vmatprep.subr.mxu0 0.0
        %2121 = vmatpush1.xpose.msra.mxu0 0.0
        %2122 = vmatprep.subr.mxu0 0.0
        %2123 = vmatpush1.xpose.msra.mxu0 0.0
        %2124 = vmatprep.subr.mxu0 0.0
        %2125 = vmatpush1.xpose.msra.mxu0 0.0
        %2126 = vmatprep.subr.mxu0 0.0
        %2127 = vmatpush1.xpose.msra.mxu0 0.0
        %2128 = vmatprep.subr.mxu0 0.0
        %2129 = vmatpush1.xpose.msra.mxu0 0.0
        %2130 = vmatprep.subr.mxu0 0.0
        %2131 = vmatpush1.xpose.msra.mxu0 0.0
        %2132 = vmatprep.subr.mxu0 0.0
        %2133 = vmatpush1.xpose.msra.mxu0 0.0
        %2134 = vmatprep.mubr.f32.mxu0 0.0
        %2135 = vmatmul.mubr.f32.gmra.mrb[0].mxu0 %v2068
        %v2136 = vpop.f32.mrb[0].mxu0
        %v2137 = vadd.f32 0.0, %v2136
        %v2138 = vpop.f32.mrb[0].mxu0
        %2139 = vdwg.mxu0
        %v2141 = vsel %vm336, %v1700, 0
        %2143 = vmatprep.subr.mxu0 0.0
        %2144 = vmatpush1.xpose.msra.mxu0 %v790
        %2145 = vmatprep.subr.mxu0 0.0
        %2146 = vmatpush1.xpose.msra.mxu0 0.0
        %2147 = vmatprep.subr.mxu0 0.0
        %2148 = vmatpush1.xpose.msra.mxu0 0.0
        %2149 = vmatprep.subr.mxu0 0.0
        %2150 = vmatpush1.xpose.msra.mxu0 0.0
        %2151 = vmatprep.subr.mxu0 0.0
        %2152 = vmatpush1.xpose.msra.mxu0 0.0
        %2153 = vmatprep.subr.mxu0 0.0
        %2154 = vmatpush1.xpose.msra.mxu0 0.0
        %2155 = vmatprep.subr.mxu0 0.0
        %2156 = vmatpush1.xpose.msra.mxu0 0.0
        %2157 = vmatprep.subr.mxu0 0.0
        %2158 = vmatpush1.xpose.msra.mxu0 0.0
        %2159 = vmatprep.subr.mxu0 0.0
        %2160 = vmatpush1.xpose.msra.mxu0 0.0
        %2161 = vmatprep.subr.mxu0 0.0
        %2162 = vmatpush1.xpose.msra.mxu0 0.0
        %2163 = vmatprep.subr.mxu0 0.0
        %2164 = vmatpush1.xpose.msra.mxu0 0.0
        %2165 = vmatprep.subr.mxu0 0.0
        %2166 = vmatpush1.xpose.msra.mxu0 0.0
        %2167 = vmatprep.subr.mxu0 0.0
        %2168 = vmatpush1.xpose.msra.mxu0 0.0
        %2169 = vmatprep.subr.mxu0 0.0
        %2170 = vmatpush1.xpose.msra.mxu0 0.0
        %2171 = vmatprep.subr.mxu0 0.0
        %2172 = vmatpush1.xpose.msra.mxu0 0.0
        %2173 = vmatprep.subr.mxu0 0.0
        %2174 = vmatpush1.xpose.msra.mxu0 0.0
        %2175 = vmatprep.subr.mxu0 0.0
        %2176 = vmatpush1.xpose.msra.mxu0 0.0
        %2177 = vmatprep.subr.mxu0 0.0
        %2178 = vmatpush1.xpose.msra.mxu0 0.0
        %2179 = vmatprep.subr.mxu0 0.0
        %2180 = vmatpush1.xpose.msra.mxu0 0.0
        %2181 = vmatprep.subr.mxu0 0.0
        %2182 = vmatpush1.xpose.msra.mxu0 0.0
        %2183 = vmatprep.subr.mxu0 0.0
        %2184 = vmatpush1.xpose.msra.mxu0 0.0
        %2185 = vmatprep.subr.mxu0 0.0
        %2186 = vmatpush1.xpose.msra.mxu0 0.0
        %2187 = vmatprep.subr.mxu0 0.0
        %2188 = vmatpush1.xpose.msra.mxu0 0.0
        %2189 = vmatprep.subr.mxu0 0.0
        %2190 = vmatpush1.xpose.msra.mxu0 0.0
        %2191 = vmatprep.subr.mxu0 0.0
        %2192 = vmatpush1.xpose.msra.mxu0 0.0
        %2193 = vmatprep.subr.mxu0 0.0
        %2194 = vmatpush1.xpose.msra.mxu0 0.0
        %2195 = vmatprep.subr.mxu0 0.0
        %2196 = vmatpush1.xpose.msra.mxu0 0.0
        %2197 = vmatprep.subr.mxu0 0.0
        %2198 = vmatpush1.xpose.msra.mxu0 0.0
        %2199 = vmatprep.subr.mxu0 0.0
        %2200 = vmatpush1.xpose.msra.mxu0 0.0
        %2201 = vmatprep.subr.mxu0 0.0
        %2202 = vmatpush1.xpose.msra.mxu0 0.0
        %2203 = vmatprep.subr.mxu0 0.0
        %2204 = vmatpush1.xpose.msra.mxu0 0.0
        %2205 = vmatprep.subr.mxu0 0.0
        %2206 = vmatpush1.xpose.msra.mxu0 0.0
        %2207 = vmatprep.mubr.f32.mxu0 0.0
        %2208 = vmatmul.mubr.f32.gmra.mrb[0].mxu0 %v2141
        %v2209 = vpop.f32.mrb[0].mxu0
        %v2210 = vadd.f32 0.0, %v2209
        %v2211 = vpop.f32.mrb[0].mxu0
        %2212 = vdwg.mxu0
        %v2214 = vsel %vm336, %v1701, 0
        %2216 = vmatprep.subr.mxu0 0.0
        %2217 = vmatpush1.xpose.msra.mxu0 %v865
        %2218 = vmatprep.subr.mxu0 0.0
        %2219 = vmatpush1.xpose.msra.mxu0 0.0
        %2220 = vmatprep.subr.mxu0 0.0
        %2221 = vmatpush1.xpose.msra.mxu0 0.0
        %2222 = vmatprep.subr.mxu0 0.0
        %2223 = vmatpush1.xpose.msra.mxu0 0.0
        %2224 = vmatprep.subr.mxu0 0.0
        %2225 = vmatpush1.xpose.msra.mxu0 0.0
        %2226 = vmatprep.subr.mxu0 0.0
        %2227 = vmatpush1.xpose.msra.mxu0 0.0
        %2228 = vmatprep.subr.mxu0 0.0
        %2229 = vmatpush1.xpose.msra.mxu0 0.0
        %2230 = vmatprep.subr.mxu0 0.0
        %2231 = vmatpush1.xpose.msra.mxu0 0.0
        %2232 = vmatprep.subr.mxu0 0.0
        %2233 = vmatpush1.xpose.msra.mxu0 0.0
        %2234 = vmatprep.subr.mxu0 0.0
        %2235 = vmatpush1.xpose.msra.mxu0 0.0
        %2236 = vmatprep.subr.mxu0 0.0
        %2237 = vmatpush1.xpose.msra.mxu0 0.0
        %2238 = vmatprep.subr.mxu0 0.0
        %2239 = vmatpush1.xpose.msra.mxu0 0.0
        %2240 = vmatprep.subr.mxu0 0.0
        %2241 = vmatpush1.xpose.msra.mxu0 0.0
        %2242 = vmatprep.subr.mxu0 0.0
        %2243 = vmatpush1.xpose.msra.mxu0 0.0
        %2244 = vmatprep.subr.mxu0 0.0
        %2245 = vmatpush1.xpose.msra.mxu0 0.0
        %2246 = vmatprep.subr.mxu0 0.0
        %2247 = vmatpush1.xpose.msra.mxu0 0.0
        %2248 = vmatprep.subr.mxu0 0.0
        %2249 = vmatpush1.xpose.msra.mxu0 0.0
        %2250 = vmatprep.subr.mxu0 0.0
        %2251 = vmatpush1.xpose.msra.mxu0 0.0
        %2252 = vmatprep.subr.mxu0 0.0
        %2253 = vmatpush1.xpose.msra.mxu0 0.0
        %2254 = vmatprep.subr.mxu0 0.0
        %2255 = vmatpush1.xpose.msra.mxu0 0.0
        %2256 = vmatprep.subr.mxu0 0.0
        %2257 = vmatpush1.xpose.msra.mxu0 0.0
        %2258 = vmatprep.subr.mxu0 0.0
        %2259 = vmatpush1.xpose.msra.mxu0 0.0
        %2260 = vmatprep.subr.mxu0 0.0
        %2261 = vmatpush1.xpose.msra.mxu0 0.0
        %2262 = vmatprep.subr.mxu0 0.0
        %2263 = vmatpush1.xpose.msra.mxu0 0.0
        %2264 = vmatprep.subr.mxu0 0.0
        %2265 = vmatpush1.xpose.msra.mxu0 0.0
        %2266 = vmatprep.subr.mxu0 0.0
        %2267 = vmatpush1.xpose.msra.mxu0 0.0
        %2268 = vmatprep.subr.mxu0 0.0
        %2269 = vmatpush1.xpose.msra.mxu0 0.0
        %2270 = vmatprep.subr.mxu0 0.0
        %2271 = vmatpush1.xpose.msra.mxu0 0.0
        %2272 = vmatprep.subr.mxu0 0.0
        %2273 = vmatpush1.xpose.msra.mxu0 0.0
        %2274 = vmatprep.subr.mxu0 0.0
        %2275 = vmatpush1.xpose.msra.mxu0 0.0
        %2276 = vmatprep.subr.mxu0 0.0
        %2277 = vmatpush1.xpose.msra.mxu0 0.0
        %2278 = vmatprep.subr.mxu0 0.0
        %2279 = vmatpush1.xpose.msra.mxu0 0.0
        %2280 = vmatprep.mubr.f32.mxu0 0.0
        %2281 = vmatmul.mubr.f32.gmra.mrb[0].mxu0 %v2214
        %v2282 = vpop.f32.mrb[0].mxu0
        %v2283 = vadd.f32 0.0, %v2282
        %v2284 = vpop.f32.mrb[0].mxu0
        %2285 = vdwg.mxu0
        %v2294 = vrot.slane %v1845, 7
        %v2295 = vsel %vm946, %v2294, %v1772
        %v2296 = vrot.slane %v1918, 6
        %v2297 = vsel %vm949, %v2296, %v2295
        %v2298 = vrot.slane %v1991, 5
        %v2299 = vsel %vm952, %v2298, %v2297
        %v2300 = vrot.slane %v2064, 4
        %v2301 = vsel %vm955, %v2300, %v2299
        %v2302 = vrot.slane %v2137, 3
        %v2303 = vsel %vm958, %v2302, %v2301
        %v2304 = vrot.slane %v2210, 2
        %v2305 = vsel %vm961, %v2304, %v2303
        %v2306 = vrot.slane %v2283, 1
        %v2307 = vsel %vm964, %v2306, %v2305
        %v2309 = vsel %vm281, %v2307, -1e+20
        %v2310 = vsel %vm968, %v2309, -inf
        %2311 = vmax.xlane.f32.xlu0 %v2310
        %v2312 = vpop.xlane.xlu0 %2311
        %v2313 = vsub.f32 %v2309, %v2312
        %v2314 = vmul.f32 %v2313, 1.442695
        %v2315 = vpow.pop %v2314
        %v2316 = vsel %vm968, %v2315, 0.0
        %2317 = vadd.xlane.f32.xlu0 %v2316
        %v2318 = vpop.xlane.xlu0 %2317
        %v2319 = vrcp.pop %v2318
        %v2320 = vmul.f32 %v2315, %v2319
        %v2322 = vcombine.high %v2320, %v2320
        %v2324 = vunpack.c.l.s4 1966171168
        %v2325 = vunpack.c.0.s8 %v2324
        %v2326 = vlaneseq
        %v2327 = vshrl.u32 %v2326, 7
        %v2328 = vsub.s32 %v2325, %v2327
        %v2329 = vrot.slane %v2320, %v2328
        %v2331 = vunpack.c.l.s4 1966171168
        %v2332 = vunpack.c.0.s8 %v2331
        %v2333 = vlaneseq
        %v2334 = vshrl.u32 %v2333, 7
        %v2335 = vsub.s32 %v2332, %v2334
        %v2336 = vrot.slane %v2322, %v2335
        %v2337 = vcombine.high %v2329, %v2329
        %v2338 = vcombine.high %v2336, %v2336
        %v2340 = vunpack.c.l.s4 1966171168
        %v2341 = vunpack.c.0.s8 %v2340
        %v2342 = vlaneseq
        %v2343 = vshrl.u32 %v2342, 7
        %v2344 = vsub.s32 %v2341, %v2343
        %v2345 = vrot.slane %v2329, %v2344
        %v2347 = vunpack.c.l.s4 1966171168
        %v2348 = vunpack.c.0.s8 %v2347
        %v2349 = vlaneseq
        %v2350 = vshrl.u32 %v2349, 7
        %v2351 = vsub.s32 %v2348, %v2350
        %v2352 = vrot.slane %v2336, %v2351
        %v2354 = vunpack.c.l.s4 1966171168
        %v2355 = vunpack.c.0.s8 %v2354
        %v2356 = vlaneseq
        %v2357 = vshrl.u32 %v2356, 7
        %v2358 = vsub.s32 %v2355, %v2357
        %v2359 = vrot.slane %v2337, %v2358
        %v2361 = vunpack.c.l.s4 1966171168
        %v2362 = vunpack.c.0.s8 %v2361
        %v2363 = vlaneseq
        %v2364 = vshrl.u32 %v2363, 7
        %v2365 = vsub.s32 %v2362, %v2364
        %v2366 = vrot.slane %v2338, %v2365
        %v2367 = vcombine.high %v2345, %v2345
        %v2368 = vcombine.high %v2352, %v2352
        %v2369 = vcombine.high %v2359, %v2359
        %v2370 = vcombine.high %v2366, %v2366
        %v2371 = vsel %vm968, %v2345, 0
        %2373 = vmatprep.subr.mxu0 0.0
        %2374 = vmatpush1.msra.mxu0 %v272
        %2375 = vmatprep.subr.mxu0 0.0
        %2376 = vmatpush1.msra.mxu0 0.0
        %2377 = vmatprep.subr.mxu0 0.0
        %2378 = vmatpush1.msra.mxu0 0.0
        %2379 = vmatprep.subr.mxu0 0.0
        %2380 = vmatpush1.msra.mxu0 0.0
        %2381 = vmatprep.subr.mxu0 0.0
        %2382 = vmatpush1.msra.mxu0 0.0
        %2383 = vmatprep.subr.mxu0 0.0
        %2384 = vmatpush1.msra.mxu0 0.0
        %2385 = vmatprep.subr.mxu0 0.0
        %2386 = vmatpush1.msra.mxu0 0.0
        %2387 = vmatprep.subr.mxu0 0.0
        %2388 = vmatpush1.msra.mxu0 0.0
        %2389 = vmatprep.subr.mxu0 0.0
        %2390 = vmatpush1.msra.mxu0 0.0
        %2391 = vmatprep.subr.mxu0 0.0
        %2392 = vmatpush1.msra.mxu0 0.0
        %2393 = vmatprep.subr.mxu0 0.0
        %2394 = vmatpush1.msra.mxu0 0.0
        %2395 = vmatprep.subr.mxu0 0.0
        %2396 = vmatpush1.msra.mxu0 0.0
        %2397 = vmatprep.subr.mxu0 0.0
        %2398 = vmatpush1.msra.mxu0 0.0
        %2399 = vmatprep.subr.mxu0 0.0
        %2400 = vmatpush1.msra.mxu0 0.0
        %2401 = vmatprep.subr.mxu0 0.0
        %2402 = vmatpush1.msra.mxu0 0.0
        %2403 = vmatprep.subr.mxu0 0.0
        %2404 = vmatpush1.msra.mxu0 0.0
        %2405 = vmatprep.subr.mxu0 0.0
        %2406 = vmatpush1.msra.mxu0 0.0
        %2407 = vmatprep.subr.mxu0 0.0
        %2408 = vmatpush1.msra.mxu0 0.0
        %2409 = vmatprep.subr.mxu0 0.0
        %2410 = vmatpush1.msra.mxu0 0.0
        %2411 = vmatprep.subr.mxu0 0.0
        %2412 = vmatpush1.msra.mxu0 0.0
        %2413 = vmatprep.subr.mxu0 0.0
        %2414 = vmatpush1.msra.mxu0 0.0
        %2415 = vmatprep.subr.mxu0 0.0
        %2416 = vmatpush1.msra.mxu0 0.0
        %2417 = vmatprep.subr.mxu0 0.0
        %2418 = vmatpush1.msra.mxu0 0.0
        %2419 = vmatprep.subr.mxu0 0.0
        %2420 = vmatpush1.msra.mxu0 0.0
        %2421 = vmatprep.subr.mxu0 0.0
        %2422 = vmatpush1.msra.mxu0 0.0
        %2423 = vmatprep.subr.mxu0 0.0
        %2424 = vmatpush1.msra.mxu0 0.0
        %2425 = vmatprep.subr.mxu0 0.0
        %2426 = vmatpush1.msra.mxu0 0.0
        %2427 = vmatprep.subr.mxu0 0.0
        %2428 = vmatpush1.msra.mxu0 0.0
        %2429 = vmatprep.subr.mxu0 0.0
        %2430 = vmatpush1.msra.mxu0 0.0
        %2431 = vmatprep.subr.mxu0 0.0
        %2432 = vmatpush1.msra.mxu0 0.0
        %2433 = vmatprep.subr.mxu0 0.0
        %2434 = vmatpush1.msra.mxu0 0.0
        %2435 = vmatprep.subr.mxu0 0.0
        %2436 = vmatpush1.msra.mxu0 0.0
        %2437 = vmatprep.mubr.f32.mxu0 0.0
        %2438 = vmatmul.mubr.f32.gmra.mrb[0].mxu0 %v2371
        %v2439 = vpop.f32.mrb[0].mxu0
        %v2440 = vadd.f32 0.0, %v2439
        %v2441 = vpop.f32.mrb[0].mxu0
        %2442 = vdwg.mxu0
        %v2443 = vsel %vm968, %v2359, 0
        %2445 = vmatprep.subr.mxu0 0.0
        %2446 = vmatpush1.msra.mxu0 %v273
        %2447 = vmatprep.subr.mxu0 0.0
        %2448 = vmatpush1.msra.mxu0 0.0
        %2449 = vmatprep.subr.mxu0 0.0
        %2450 = vmatpush1.msra.mxu0 0.0
        %2451 = vmatprep.subr.mxu0 0.0
        %2452 = vmatpush1.msra.mxu0 0.0
        %2453 = vmatprep.subr.mxu0 0.0
        %2454 = vmatpush1.msra.mxu0 0.0
        %2455 = vmatprep.subr.mxu0 0.0
        %2456 = vmatpush1.msra.mxu0 0.0
        %2457 = vmatprep.subr.mxu0 0.0
        %2458 = vmatpush1.msra.mxu0 0.0
        %2459 = vmatprep.subr.mxu0 0.0
        %2460 = vmatpush1.msra.mxu0 0.0
        %2461 = vmatprep.subr.mxu0 0.0
        %2462 = vmatpush1.msra.mxu0 0.0
        %2463 = vmatprep.subr.mxu0 0.0
        %2464 = vmatpush1.msra.mxu0 0.0
        %2465 = vmatprep.subr.mxu0 0.0
        %2466 = vmatpush1.msra.mxu0 0.0
        %2467 = vmatprep.subr.mxu0 0.0
        %2468 = vmatpush1.msra.mxu0 0.0
        %2469 = vmatprep.subr.mxu0 0.0
        %2470 = vmatpush1.msra.mxu0 0.0
        %2471 = vmatprep.subr.mxu0 0.0
        %2472 = vmatpush1.msra.mxu0 0.0
        %2473 = vmatprep.subr.mxu0 0.0
        %2474 = vmatpush1.msra.mxu0 0.0
        %2475 = vmatprep.subr.mxu0 0.0
        %2476 = vmatpush1.msra.mxu0 0.0
        %2477 = vmatprep.subr.mxu0 0.0
        %2478 = vmatpush1.msra.mxu0 0.0
        %2479 = vmatprep.subr.mxu0 0.0
        %2480 = vmatpush1.msra.mxu0 0.0
        %2481 = vmatprep.subr.mxu0 0.0
        %2482 = vmatpush1.msra.mxu0 0.0
        %2483 = vmatprep.subr.mxu0 0.0
        %2484 = vmatpush1.msra.mxu0 0.0
        %2485 = vmatprep.subr.mxu0 0.0
        %2486 = vmatpush1.msra.mxu0 0.0
        %2487 = vmatprep.subr.mxu0 0.0
        %2488 = vmatpush1.msra.mxu0 0.0
        %2489 = vmatprep.subr.mxu0 0.0
        %2490 = vmatpush1.msra.mxu0 0.0
        %2491 = vmatprep.subr.mxu0 0.0
        %2492 = vmatpush1.msra.mxu0 0.0
        %2493 = vmatprep.subr.mxu0 0.0
        %2494 = vmatpush1.msra.mxu0 0.0
        %2495 = vmatprep.subr.mxu0 0.0
        %2496 = vmatpush1.msra.mxu0 0.0
        %2497 = vmatprep.subr.mxu0 0.0
        %2498 = vmatpush1.msra.mxu0 0.0
        %2499 = vmatprep.subr.mxu0 0.0
        %2500 = vmatpush1.msra.mxu0 0.0
        %2501 = vmatprep.subr.mxu0 0.0
        %2502 = vmatpush1.msra.mxu0 0.0
        %2503 = vmatprep.subr.mxu0 0.0
        %2504 = vmatpush1.msra.mxu0 0.0
        %2505 = vmatprep.subr.mxu0 0.0
        %2506 = vmatpush1.msra.mxu0 0.0
        %2507 = vmatprep.subr.mxu0 0.0
        %2508 = vmatpush1.msra.mxu0 0.0
        %2509 = vmatprep.mubr.f32.mxu0 0.0
        %2510 = vmatmul.mubr.f32.gmra.mrb[0].mxu0 %v2443
        %v2511 = vpop.f32.mrb[0].mxu0
        %v2512 = vadd.f32 0.0, %v2511
        %v2513 = vpop.f32.mrb[0].mxu0
        %2514 = vdwg.mxu0
        %v2515 = vsel %vm968, %v2367, 0
        %2517 = vmatprep.subr.mxu0 0.0
        %2518 = vmatpush1.msra.mxu0 %v274
        %2519 = vmatprep.subr.mxu0 0.0
        %2520 = vmatpush1.msra.mxu0 0.0
        %2521 = vmatprep.subr.mxu0 0.0
        %2522 = vmatpush1.msra.mxu0 0.0
        %2523 = vmatprep.subr.mxu0 0.0
        %2524 = vmatpush1.msra.mxu0 0.0
        %2525 = vmatprep.subr.mxu0 0.0
        %2526 = vmatpush1.msra.mxu0 0.0
        %2527 = vmatprep.subr.mxu0 0.0
        %2528 = vmatpush1.msra.mxu0 0.0
        %2529 = vmatprep.subr.mxu0 0.0
        %2530 = vmatpush1.msra.mxu0 0.0
        %2531 = vmatprep.subr.mxu0 0.0
        %2532 = vmatpush1.msra.mxu0 0.0
        %2533 = vmatprep.subr.mxu0 0.0
        %2534 = vmatpush1.msra.mxu0 0.0
        %2535 = vmatprep.subr.mxu0 0.0
        %2536 = vmatpush1.msra.mxu0 0.0
        %2537 = vmatprep.subr.mxu0 0.0
        %2538 = vmatpush1.msra.mxu0 0.0
        %2539 = vmatprep.subr.mxu0 0.0
        %2540 = vmatpush1.msra.mxu0 0.0
        %2541 = vmatprep.subr.mxu0 0.0
        %2542 = vmatpush1.msra.mxu0 0.0
        %2543 = vmatprep.subr.mxu0 0.0
        %2544 = vmatpush1.msra.mxu0 0.0
        %2545 = vmatprep.subr.mxu0 0.0
        %2546 = vmatpush1.msra.mxu0 0.0
        %2547 = vmatprep.subr.mxu0 0.0
        %2548 = vmatpush1.msra.mxu0 0.0
        %2549 = vmatprep.subr.mxu0 0.0
        %2550 = vmatpush1.msra.mxu0 0.0
        %2551 = vmatprep.subr.mxu0 0.0
        %2552 = vmatpush1.msra.mxu0 0.0
        %2553 = vmatprep.subr.mxu0 0.0
        %2554 = vmatpush1.msra.mxu0 0.0
        %2555 = vmatprep.subr.mxu0 0.0
        %2556 = vmatpush1.msra.mxu0 0.0
        %2557 = vmatprep.subr.mxu0 0.0
        %2558 = vmatpush1.msra.mxu0 0.0
        %2559 = vmatprep.subr.mxu0 0.0
        %2560 = vmatpush1.msra.mxu0 0.0
        %2561 = vmatprep.subr.mxu0 0.0
        %2562 = vmatpush1.msra.mxu0 0.0
        %2563 = vmatprep.subr.mxu0 0.0
        %2564 = vmatpush1.msra.mxu0 0.0
        %2565 = vmatprep.subr.mxu0 0.0
        %2566 = vmatpush1.msra.mxu0 0.0
        %2567 = vmatprep.subr.mxu0 0.0
        %2568 = vmatpush1.msra.mxu0 0.0
        %2569 = vmatprep.subr.mxu0 0.0
        %2570 = vmatpush1.msra.mxu0 0.0
        %2571 = vmatprep.subr.mxu0 0.0
        %2572 = vmatpush1.msra.mxu0 0.0
        %2573 = vmatprep.subr.mxu0 0.0
        %2574 = vmatpush1.msra.mxu0 0.0
        %2575 = vmatprep.subr.mxu0 0.0
        %2576 = vmatpush1.msra.mxu0 0.0
        %2577 = vmatprep.subr.mxu0 0.0
        %2578 = vmatpush1.msra.mxu0 0.0
        %2579 = vmatprep.subr.mxu0 0.0
        %2580 = vmatpush1.msra.mxu0 0.0
        %2581 = vmatprep.mubr.f32.mxu0 0.0
        %2582 = vmatmul.mubr.f32.gmra.mrb[0].mxu0 %v2515
        %v2583 = vpop.f32.mrb[0].mxu0
        %v2584 = vadd.f32 0.0, %v2583
        %v2585 = vpop.f32.mrb[0].mxu0
        %2586 = vdwg.mxu0
        %v2587 = vsel %vm968, %v2369, 0
        %2589 = vmatprep.subr.mxu0 0.0
        %2590 = vmatpush1.msra.mxu0 %v275
        %2591 = vmatprep.subr.mxu0 0.0
        %2592 = vmatpush1.msra.mxu0 0.0
        %2593 = vmatprep.subr.mxu0 0.0
        %2594 = vmatpush1.msra.mxu0 0.0
        %2595 = vmatprep.subr.mxu0 0.0
        %2596 = vmatpush1.msra.mxu0 0.0
        %2597 = vmatprep.subr.mxu0 0.0
        %2598 = vmatpush1.msra.mxu0 0.0
        %2599 = vmatprep.subr.mxu0 0.0
        %2600 = vmatpush1.msra.mxu0 0.0
        %2601 = vmatprep.subr.mxu0 0.0
        %2602 = vmatpush1.msra.mxu0 0.0
        %2603 = vmatprep.subr.mxu0 0.0
        %2604 = vmatpush1.msra.mxu0 0.0
        %2605 = vmatprep.subr.mxu0 0.0
        %2606 = vmatpush1.msra.mxu0 0.0
        %2607 = vmatprep.subr.mxu0 0.0
        %2608 = vmatpush1.msra.mxu0 0.0
        %2609 = vmatprep.subr.mxu0 0.0
        %2610 = vmatpush1.msra.mxu0 0.0
        %2611 = vmatprep.subr.mxu0 0.0
        %2612 = vmatpush1.msra.mxu0 0.0
        %2613 = vmatprep.subr.mxu0 0.0
        %2614 = vmatpush1.msra.mxu0 0.0
        %2615 = vmatprep.subr.mxu0 0.0
        %2616 = vmatpush1.msra.mxu0 0.0
        %2617 = vmatprep.subr.mxu0 0.0
        %2618 = vmatpush1.msra.mxu0 0.0
        %2619 = vmatprep.subr.mxu0 0.0
        %2620 = vmatpush1.msra.mxu0 0.0
        %2621 = vmatprep.subr.mxu0 0.0
        %2622 = vmatpush1.msra.mxu0 0.0
        %2623 = vmatprep.subr.mxu0 0.0
        %2624 = vmatpush1.msra.mxu0 0.0
        %2625 = vmatprep.subr.mxu0 0.0
        %2626 = vmatpush1.msra.mxu0 0.0
        %2627 = vmatprep.subr.mxu0 0.0
        %2628 = vmatpush1.msra.mxu0 0.0
        %2629 = vmatprep.subr.mxu0 0.0
        %2630 = vmatpush1.msra.mxu0 0.0
        %2631 = vmatprep.subr.mxu0 0.0
        %2632 = vmatpush1.msra.mxu0 0.0
        %2633 = vmatprep.subr.mxu0 0.0
        %2634 = vmatpush1.msra.mxu0 0.0
        %2635 = vmatprep.subr.mxu0 0.0
        %2636 = vmatpush1.msra.mxu0 0.0
        %2637 = vmatprep.subr.mxu0 0.0
        %2638 = vmatpush1.msra.mxu0 0.0
        %2639 = vmatprep.subr.mxu0 0.0
        %2640 = vmatpush1.msra.mxu0 0.0
        %2641 = vmatprep.subr.mxu0 0.0
        %2642 = vmatpush1.msra.mxu0 0.0
        %2643 = vmatprep.subr.mxu0 0.0
        %2644 = vmatpush1.msra.mxu0 0.0
        %2645 = vmatprep.subr.mxu0 0.0
        %2646 = vmatpush1.msra.mxu0 0.0
        %2647 = vmatprep.subr.mxu0 0.0
        %2648 = vmatpush1.msra.mxu0 0.0
        %2649 = vmatprep.subr.mxu0 0.0
        %2650 = vmatpush1.msra.mxu0 0.0
        %2651 = vmatprep.subr.mxu0 0.0
        %2652 = vmatpush1.msra.mxu0 0.0
        %2653 = vmatprep.mubr.f32.mxu0 0.0
        %2654 = vmatmul.mubr.f32.gmra.mrb[0].mxu0 %v2587
        %v2655 = vpop.f32.mrb[0].mxu0
        %v2656 = vadd.f32 0.0, %v2655
        %v2657 = vpop.f32.mrb[0].mxu0
        %2658 = vdwg.mxu0
        %v2659 = vsel %vm968, %v2352, 0
        %2661 = vmatprep.subr.mxu0 0.0
        %2662 = vmatpush1.msra.mxu0 %v276
        %2663 = vmatprep.subr.mxu0 0.0
        %2664 = vmatpush1.msra.mxu0 0.0
        %2665 = vmatprep.subr.mxu0 0.0
        %2666 = vmatpush1.msra.mxu0 0.0
        %2667 = vmatprep.subr.mxu0 0.0
        %2668 = vmatpush1.msra.mxu0 0.0
        %2669 = vmatprep.subr.mxu0 0.0
        %2670 = vmatpush1.msra.mxu0 0.0
        %2671 = vmatprep.subr.mxu0 0.0
        %2672 = vmatpush1.msra.mxu0 0.0
        %2673 = vmatprep.subr.mxu0 0.0
        %2674 = vmatpush1.msra.mxu0 0.0
        %2675 = vmatprep.subr.mxu0 0.0
        %2676 = vmatpush1.msra.mxu0 0.0
        %2677 = vmatprep.subr.mxu0 0.0
        %2678 = vmatpush1.msra.mxu0 0.0
        %2679 = vmatprep.subr.mxu0 0.0
        %2680 = vmatpush1.msra.mxu0 0.0
        %2681 = vmatprep.subr.mxu0 0.0
        %2682 = vmatpush1.msra.mxu0 0.0
        %2683 = vmatprep.subr.mxu0 0.0
        %2684 = vmatpush1.msra.mxu0 0.0
        %2685 = vmatprep.subr.mxu0 0.0
        %2686 = vmatpush1.msra.mxu0 0.0
        %2687 = vmatprep.subr.mxu0 0.0
        %2688 = vmatpush1.msra.mxu0 0.0
        %2689 = vmatprep.subr.mxu0 0.0
        %2690 = vmatpush1.msra.mxu0 0.0
        %2691 = vmatprep.subr.mxu0 0.0
        %2692 = vmatpush1.msra.mxu0 0.0
        %2693 = vmatprep.subr.mxu0 0.0
        %2694 = vmatpush1.msra.mxu0 0.0
        %2695 = vmatprep.subr.mxu0 0.0
        %2696 = vmatpush1.msra.mxu0 0.0
        %2697 = vmatprep.subr.mxu0 0.0
        %2698 = vmatpush1.msra.mxu0 0.0
        %2699 = vmatprep.subr.mxu0 0.0
        %2700 = vmatpush1.msra.mxu0 0.0
        %2701 = vmatprep.subr.mxu0 0.0
        %2702 = vmatpush1.msra.mxu0 0.0
        %2703 = vmatprep.subr.mxu0 0.0
        %2704 = vmatpush1.msra.mxu0 0.0
        %2705 = vmatprep.subr.mxu0 0.0
        %2706 = vmatpush1.msra.mxu0 0.0
        %2707 = vmatprep.subr.mxu0 0.0
        %2708 = vmatpush1.msra.mxu0 0.0
        %2709 = vmatprep.subr.mxu0 0.0
        %2710 = vmatpush1.msra.mxu0 0.0
        %2711 = vmatprep.subr.mxu0 0.0
        %2712 = vmatpush1.msra.mxu0 0.0
        %2713 = vmatprep.subr.mxu0 0.0
        %2714 = vmatpush1.msra.mxu0 0.0
        %2715 = vmatprep.subr.mxu0 0.0
        %2716 = vmatpush1.msra.mxu0 0.0
        %2717 = vmatprep.subr.mxu0 0.0
        %2718 = vmatpush1.msra.mxu0 0.0
        %2719 = vmatprep.subr.mxu0 0.0
        %2720 = vmatpush1.msra.mxu0 0.0
        %2721 = vmatprep.subr.mxu0 0.0
        %2722 = vmatpush1.msra.mxu0 0.0
        %2723 = vmatprep.subr.mxu0 0.0
        %2724 = vmatpush1.msra.mxu0 0.0
        %2725 = vmatprep.mubr.f32.mxu0 0.0
        %2726 = vmatmul.mubr.f32.gmra.mrb[0].mxu0 %v2659
        %v2727 = vpop.f32.mrb[0].mxu0
        %v2728 = vadd.f32 0.0, %v2727
        %v2729 = vpop.f32.mrb[0].mxu0
        %2730 = vdwg.mxu0
        %v2731 = vsel %vm968, %v2366, 0
        %2733 = vmatprep.subr.mxu0 0.0
        %2734 = vmatpush1.msra.mxu0 %v277
        %2735 = vmatprep.subr.mxu0 0.0
        %2736 = vmatpush1.msra.mxu0 0.0
        %2737 = vmatprep.subr.mxu0 0.0
        %2738 = vmatpush1.msra.mxu0 0.0
        %2739 = vmatprep.subr.mxu0 0.0
        %2740 = vmatpush1.msra.mxu0 0.0
        %2741 = vmatprep.subr.mxu0 0.0
        %2742 = vmatpush1.msra.mxu0 0.0
        %2743 = vmatprep.subr.mxu0 0.0
        %2744 = vmatpush1.msra.mxu0 0.0
        %2745 = vmatprep.subr.mxu0 0.0
        %2746 = vmatpush1.msra.mxu0 0.0
        %2747 = vmatprep.subr.mxu0 0.0
        %2748 = vmatpush1.msra.mxu0 0.0
        %2749 = vmatprep.subr.mxu0 0.0
        %2750 = vmatpush1.msra.mxu0 0.0
        %2751 = vmatprep.subr.mxu0 0.0
        %2752 = vmatpush1.msra.mxu0 0.0
        %2753 = vmatprep.subr.mxu0 0.0
        %2754 = vmatpush1.msra.mxu0 0.0
        %2755 = vmatprep.subr.mxu0 0.0
        %2756 = vmatpush1.msra.mxu0 0.0
        %2757 = vmatprep.subr.mxu0 0.0
        %2758 = vmatpush1.msra.mxu0 0.0
        %2759 = vmatprep.subr.mxu0 0.0
        %2760 = vmatpush1.msra.mxu0 0.0
        %2761 = vmatprep.subr.mxu0 0.0
        %2762 = vmatpush1.msra.mxu0 0.0
        %2763 = vmatprep.subr.mxu0 0.0
        %2764 = vmatpush1.msra.mxu0 0.0
        %2765 = vmatprep.subr.mxu0 0.0
        %2766 = vmatpush1.msra.mxu0 0.0
        %2767 = vmatprep.subr.mxu0 0.0
        %2768 = vmatpush1.msra.mxu0 0.0
        %2769 = vmatprep.subr.mxu0 0.0
        %2770 = vmatpush1.msra.mxu0 0.0
        %2771 = vmatprep.subr.mxu0 0.0
        %2772 = vmatpush1.msra.mxu0 0.0
        %2773 = vmatprep.subr.mxu0 0.0
        %2774 = vmatpush1.msra.mxu0 0.0
        %2775 = vmatprep.subr.mxu0 0.0
        %2776 = vmatpush1.msra.mxu0 0.0
        %2777 = vmatprep.subr.mxu0 0.0
        %2778 = vmatpush1.msra.mxu0 0.0
        %2779 = vmatprep.subr.mxu0 0.0
        %2780 = vmatpush1.msra.mxu0 0.0
        %2781 = vmatprep.subr.mxu0 0.0
        %2782 = vmatpush1.msra.mxu0 0.0
        %2783 = vmatprep.subr.mxu0 0.0
        %2784 = vmatpush1.msra.mxu0 0.0
        %2785 = vmatprep.subr.mxu0 0.0
        %2786 = vmatpush1.msra.mxu0 0.0
        %2787 = vmatprep.subr.mxu0 0.0
        %2788 = vmatpush1.msra.mxu0 0.0
        %2789 = vmatprep.subr.mxu0 0.0
        %2790 = vmatpush1.msra.mxu0 0.0
        %2791 = vmatprep.subr.mxu0 0.0
        %2792 = vmatpush1.msra.mxu0 0.0
        %2793 = vmatprep.subr.mxu0 0.0
        %2794 = vmatpush1.msra.mxu0 0.0
        %2795 = vmatprep.subr.mxu0 0.0
        %2796 = vmatpush1.msra.mxu0 0.0
        %2797 = vmatprep.mubr.f32.mxu0 0.0
        %2798 = vmatmul.mubr.f32.gmra.mrb[0].mxu0 %v2731
        %v2799 = vpop.f32.mrb[0].mxu0
        %v2800 = vadd.f32 0.0, %v2799
        %v2801 = vpop.f32.mrb[0].mxu0
        %2802 = vdwg.mxu0
        %v2803 = vsel %vm968, %v2368, 0
        %2805 = vmatprep.subr.mxu0 0.0
        %2806 = vmatpush1.msra.mxu0 %v278
        %2807 = vmatprep.subr.mxu0 0.0
        %2808 = vmatpush1.msra.mxu0 0.0
        %2809 = vmatprep.subr.mxu0 0.0
        %2810 = vmatpush1.msra.mxu0 0.0
        %2811 = vmatprep.subr.mxu0 0.0
        %2812 = vmatpush1.msra.mxu0 0.0
        %2813 = vmatprep.subr.mxu0 0.0
        %2814 = vmatpush1.msra.mxu0 0.0
        %2815 = vmatprep.subr.mxu0 0.0
        %2816 = vmatpush1.msra.mxu0 0.0
        %2817 = vmatprep.subr.mxu0 0.0
        %2818 = vmatpush1.msra.mxu0 0.0
        %2819 = vmatprep.subr.mxu0 0.0
        %2820 = vmatpush1.msra.mxu0 0.0
        %2821 = vmatprep.subr.mxu0 0.0
        %2822 = vmatpush1.msra.mxu0 0.0
        %2823 = vmatprep.subr.mxu0 0.0
        %2824 = vmatpush1.msra.mxu0 0.0
        %2825 = vmatprep.subr.mxu0 0.0
        %2826 = vmatpush1.msra.mxu0 0.0
        %2827 = vmatprep.subr.mxu0 0.0
        %2828 = vmatpush1.msra.mxu0 0.0
        %2829 = vmatprep.subr.mxu0 0.0
        %2830 = vmatpush1.msra.mxu0 0.0
        %2831 = vmatprep.subr.mxu0 0.0
        %2832 = vmatpush1.msra.mxu0 0.0
        %2833 = vmatprep.subr.mxu0 0.0
        %2834 = vmatpush1.msra.mxu0 0.0
        %2835 = vmatprep.subr.mxu0 0.0
        %2836 = vmatpush1.msra.mxu0 0.0
        %2837 = vmatprep.subr.mxu0 0.0
        %2838 = vmatpush1.msra.mxu0 0.0
        %2839 = vmatprep.subr.mxu0 0.0
        %2840 = vmatpush1.msra.mxu0 0.0
        %2841 = vmatprep.subr.mxu0 0.0
        %2842 = vmatpush1.msra.mxu0 0.0
        %2843 = vmatprep.subr.mxu0 0.0
        %2844 = vmatpush1.msra.mxu0 0.0
        %2845 = vmatprep.subr.mxu0 0.0
        %2846 = vmatpush1.msra.mxu0 0.0
        %2847 = vmatprep.subr.mxu0 0.0
        %2848 = vmatpush1.msra.mxu0 0.0
        %2849 = vmatprep.subr.mxu0 0.0
        %2850 = vmatpush1.msra.mxu0 0.0
        %2851 = vmatprep.subr.mxu0 0.0
        %2852 = vmatpush1.msra.mxu0 0.0
        %2853 = vmatprep.subr.mxu0 0.0
        %2854 = vmatpush1.msra.mxu0 0.0
        %2855 = vmatprep.subr.mxu0 0.0
        %2856 = vmatpush1.msra.mxu0 0.0
        %2857 = vmatprep.subr.mxu0 0.0
        %2858 = vmatpush1.msra.mxu0 0.0
        %2859 = vmatprep.subr.mxu0 0.0
        %2860 = vmatpush1.msra.mxu0 0.0
        %2861 = vmatprep.subr.mxu0 0.0
        %2862 = vmatpush1.msra.mxu0 0.0
        %2863 = vmatprep.subr.mxu0 0.0
        %2864 = vmatpush1.msra.mxu0 0.0
        %2865 = vmatprep.subr.mxu0 0.0
        %2866 = vmatpush1.msra.mxu0 0.0
        %2867 = vmatprep.subr.mxu0 0.0
        %2868 = vmatpush1.msra.mxu0 0.0
        %2869 = vmatprep.mubr.f32.mxu0 0.0
        %2870 = vmatmul.mubr.f32.gmra.mrb[0].mxu0 %v2803
        %v2871 = vpop.f32.mrb[0].mxu0
        %v2872 = vadd.f32 0.0, %v2871
        %v2873 = vpop.f32.mrb[0].mxu0
        %2874 = vdwg.mxu0
        %v2875 = vsel %vm968, %v2370, 0
        %2877 = vmatprep.subr.mxu0 0.0
        %2878 = vmatpush1.msra.mxu0 %v279
        %2879 = vmatprep.subr.mxu0 0.0
        %2880 = vmatpush1.msra.mxu0 0.0
        %2881 = vmatprep.subr.mxu0 0.0
        %2882 = vmatpush1.msra.mxu0 0.0
        %2883 = vmatprep.subr.mxu0 0.0
        %2884 = vmatpush1.msra.mxu0 0.0
        %2885 = vmatprep.subr.mxu0 0.0
        %2886 = vmatpush1.msra.mxu0 0.0
        %2887 = vmatprep.subr.mxu0 0.0
        %2888 = vmatpush1.msra.mxu0 0.0
        %2889 = vmatprep.subr.mxu0 0.0
        %2890 = vmatpush1.msra.mxu0 0.0
        %2891 = vmatprep.subr.mxu0 0.0
        %2892 = vmatpush1.msra.mxu0 0.0
        %2893 = vmatprep.subr.mxu0 0.0
        %2894 = vmatpush1.msra.mxu0 0.0
        %2895 = vmatprep.subr.mxu0 0.0
        %2896 = vmatpush1.msra.mxu0 0.0
        %2897 = vmatprep.subr.mxu0 0.0
        %2898 = vmatpush1.msra.mxu0 0.0
        %2899 = vmatprep.subr.mxu0 0.0
        %2900 = vmatpush1.msra.mxu0 0.0
        %2901 = vmatprep.subr.mxu0 0.0
        %2902 = vmatpush1.msra.mxu0 0.0
        %2903 = vmatprep.subr.mxu0 0.0
        %2904 = vmatpush1.msra.mxu0 0.0
        %2905 = vmatprep.subr.mxu0 0.0
        %2906 = vmatpush1.msra.mxu0 0.0
        %2907 = vmatprep.subr.mxu0 0.0
        %2908 = vmatpush1.msra.mxu0 0.0
        %2909 = vmatprep.subr.mxu0 0.0
        %2910 = vmatpush1.msra.mxu0 0.0
        %2911 = vmatprep.subr.mxu0 0.0
        %2912 = vmatpush1.msra.mxu0 0.0
        %2913 = vmatprep.subr.mxu0 0.0
        %2914 = vmatpush1.msra.mxu0 0.0
        %2915 = vmatprep.subr.mxu0 0.0
        %2916 = vmatpush1.msra.mxu0 0.0
        %2917 = vmatprep.subr.mxu0 0.0
        %2918 = vmatpush1.msra.mxu0 0.0
        %2919 = vmatprep.subr.mxu0 0.0
        %2920 = vmatpush1.msra.mxu0 0.0
        %2921 = vmatprep.subr.mxu0 0.0
        %2922 = vmatpush1.msra.mxu0 0.0
        %2923 = vmatprep.subr.mxu0 0.0
        %2924 = vmatpush1.msra.mxu0 0.0
        %2925 = vmatprep.subr.mxu0 0.0
        %2926 = vmatpush1.msra.mxu0 0.0
        %2927 = vmatprep.subr.mxu0 0.0
        %2928 = vmatpush1.msra.mxu0 0.0
        %2929 = vmatprep.subr.mxu0 0.0
        %2930 = vmatpush1.msra.mxu0 0.0
        %2931 = vmatprep.subr.mxu0 0.0
        %2932 = vmatpush1.msra.mxu0 0.0
        %2933 = vmatprep.subr.mxu0 0.0
        %2934 = vmatpush1.msra.mxu0 0.0
        %2935 = vmatprep.subr.mxu0 0.0
        %2936 = vmatpush1.msra.mxu0 0.0
        %2937 = vmatprep.subr.mxu0 0.0
        %2938 = vmatpush1.msra.mxu0 0.0
        %2939 = vmatprep.subr.mxu0 0.0
        %2940 = vmatpush1.msra.mxu0 0.0
        %2941 = vmatprep.mubr.f32.mxu0 0.0
        %2942 = vmatmul.mubr.f32.gmra.mrb[0].mxu0 %v2875
        %v2943 = vpop.f32.mrb[0].mxu0
        %v2944 = vadd.f32 0.0, %v2943
        %v2945 = vpop.f32.mrb[0].mxu0
        %2946 = vdwg.mxu0
        %v2947 = vrot.slane %v1695, 7
        %v2948 = vsel %vm946, %v2947, %v1694
        %v2949 = vrot.slane %v1696, 6
        %v2950 = vsel %vm949, %v2949, %v2948
        %v2951 = vrot.slane %v1697, 5
        %v2952 = vsel %vm952, %v2951, %v2950
        %v2953 = vrot.slane %v1698, 4
        %v2954 = vsel %vm955, %v2953, %v2952
        %v2955 = vrot.slane %v1699, 3
        %v2956 = vsel %vm958, %v2955, %v2954
        %v2957 = vrot.slane %v1700, 2
        %v2958 = vsel %vm961, %v2957, %v2956
        %v2959 = vrot.slane %v1701, 1
        %v2960 = vsel %vm964, %v2959, %v2958
        %v2961 = vsel %vm336, %v2960, 0
        %2963 = vmatprep.subr.mxu0 0.0
        %2964 = vmatpush1.msra.mxu0 %v282
        %2965 = vmatprep.subr.mxu0 0.0
        %2966 = vmatpush1.msra.mxu0 %v283
        %2967 = vmatprep.subr.mxu0 0.0
        %2968 = vmatpush1.msra.mxu0 %v284
        %2969 = vmatprep.subr.mxu0 0.0
        %2970 = vmatpush1.msra.mxu0 %v285
        %2971 = vmatprep.subr.mxu0 0.0
        %2972 = vmatpush1.msra.mxu0 0.0
        %2973 = vmatprep.subr.mxu0 0.0
        %2974 = vmatpush1.msra.mxu0 0.0
        %2975 = vmatprep.subr.mxu0 0.0
        %2976 = vmatpush1.msra.mxu0 0.0
        %2977 = vmatprep.subr.mxu0 0.0
        %2978 = vmatpush1.msra.mxu0 0.0
        %2979 = vmatprep.subr.mxu0 0.0
        %2980 = vmatpush1.msra.mxu0 0.0
        %2981 = vmatprep.subr.mxu0 0.0
        %2982 = vmatpush1.msra.mxu0 0.0
        %2983 = vmatprep.subr.mxu0 0.0
        %2984 = vmatpush1.msra.mxu0 0.0
        %2985 = vmatprep.subr.mxu0 0.0
        %2986 = vmatpush1.msra.mxu0 0.0
        %2987 = vmatprep.subr.mxu0 0.0
        %2988 = vmatpush1.msra.mxu0 0.0
        %2989 = vmatprep.subr.mxu0 0.0
        %2990 = vmatpush1.msra.mxu0 0.0
        %2991 = vmatprep.subr.mxu0 0.0
        %2992 = vmatpush1.msra.mxu0 0.0
        %2993 = vmatprep.subr.mxu0 0.0
        %2994 = vmatpush1.msra.mxu0 0.0
        %2995 = vmatprep.subr.mxu0 0.0
        %2996 = vmatpush1.msra.mxu0 0.0
        %2997 = vmatprep.subr.mxu0 0.0
        %2998 = vmatpush1.msra.mxu0 0.0
        %2999 = vmatprep.subr.mxu0 0.0
        %3000 = vmatpush1.msra.mxu0 0.0
        %3001 = vmatprep.subr.mxu0 0.0
        %3002 = vmatpush1.msra.mxu0 0.0
        %3003 = vmatprep.subr.mxu0 0.0
        %3004 = vmatpush1.msra.mxu0 0.0
        %3005 = vmatprep.subr.mxu0 0.0
        %3006 = vmatpush1.msra.mxu0 0.0
        %3007 = vmatprep.subr.mxu0 0.0
        %3008 = vmatpush1.msra.mxu0 0.0
        %3009 = vmatprep.subr.mxu0 0.0
        %3010 = vmatpush1.msra.mxu0 0.0
        %3011 = vmatprep.subr.mxu0 0.0
        %3012 = vmatpush1.msra.mxu0 0.0
        %3013 = vmatprep.subr.mxu0 0.0
        %3014 = vmatpush1.msra.mxu0 0.0
        %3015 = vmatprep.subr.mxu0 0.0
        %3016 = vmatpush1.msra.mxu0 0.0
        %3017 = vmatprep.subr.mxu0 0.0
        %3018 = vmatpush1.msra.mxu0 0.0
        %3019 = vmatprep.subr.mxu0 0.0
        %3020 = vmatpush1.msra.mxu0 0.0
        %3021 = vmatprep.subr.mxu0 0.0
        %3022 = vmatpush1.msra.mxu0 0.0
        %3023 = vmatprep.subr.mxu0 0.0
        %3024 = vmatpush1.msra.mxu0 0.0
        %3025 = vmatprep.subr.mxu0 0.0
        %3026 = vmatpush1.msra.mxu0 0.0
        %3027 = vmatprep.mubr.f32.mxu0 0.0
        %3028 = vmatmul.mubr.f32.gmra.mrb[0].mxu0 %v2961
        %v3029 = vpop.f32.mrb[0].mxu0
        %v3030 = vadd.f32 0.0, %v3029
        %v3031 = vpop.f32.mrb[0].mxu0
        %3032 = vdwg.mxu0
        %v3034 = vrot.slane %v3030, 1
        %v3035 = vrot.slane %v3030, 2
        %v3036 = vrot.slane %v3030, 3
        %v3037 = vrot.slane %v3030, 4
        %v3038 = vrot.slane %v3030, 5
        %v3039 = vrot.slane %v3030, 6
        %v3040 = vrot.slane %v3030, 7
        %v3049 = vadd.f32 %v2440, %v3030
        %v3050 = vadd.f32 %v2512, %v3034
        %v3051 = vadd.f32 %v2584, %v3035
        %v3052 = vadd.f32 %v2656, %v3036
        %v3053 = vadd.f32 %v2728, %v3037
        %v3054 = vadd.f32 %v2800, %v3038
        %v3055 = vadd.f32 %v2872, %v3039
        %v3056 = vadd.f32 %v2944, %v3040
        %v3065 = vrot.slane %v3050, 7
        %v3066 = vsel %vm946, %v3065, %v3049
        %v3067 = vrot.slane %v3051, 6
        %v3068 = vsel %vm949, %v3067, %v3066
        %v3069 = vrot.slane %v3052, 5
        %v3070 = vsel %vm952, %v3069, %v3068
        %v3071 = vrot.slane %v3053, 4
        %v3072 = vsel %vm955, %v3071, %v3070
        %v3073 = vrot.slane %v3054, 3
        %v3074 = vsel %vm958, %v3073, %v3072
        %v3075 = vrot.slane %v3055, 2
        %v3076 = vsel %vm961, %v3075, %v3074
        %v3077 = vrot.slane %v3056, 1
        %v3078 = vsel %vm964, %v3077, %v3076
        %3080 = vst.msk [vmem:[%s265] sm:$0xff] %vm336, %v3078
        %s3081 = sand.u32 %s131, 1
        %s3082 = scalar_lea.sflag [#allocation4], %s3081
        %s3083 = sand.u32 %s131, 1
        %s3084 = smul.addr %s3083, 8
        %s3085 = scalar_lea.vmem [#allocation7], %s3084
        // Predicated region
        $region45: #{tpu_custom_call.1} parent=35 // pred_check
          %p3086 = pneg %p141
        $region46: #{tpu_custom_call.1} parent=35 // pred_check_branch
          %3088 = sbr.rel (%p3086) target = $region48
        $region47: #{tpu_custom_call.1} parent=35 // pred_region
          %s3090 = ssub.s32 128, 128
          %3091 = vsyncadd %s3082, %s3090
          %s3092 = smul.addr %s24, 128
          %s3093 = scalar_lea.hbm %s4, %s3092
          %s3095 = sshll.u32 %s3085, 4
          %s3096 = int_to_ptr.vmem [resolvable:$true] %s3095
          %3098 = dma.vmem_to_hbm [thread:$0]  %s3096, 128, %s3093, %s3082
        $region48: #{tpu_custom_call.1} parent=35 // pred_fallthru
          _
      $region36: #{tpu_custom_call.1} parent=5 // pred_fallthru
        _
      %p3099 = scmp.le.s32.totalorder 2, %s19
      // Predicated region
      $region49: #{tpu_custom_call.1} parent=5 // pred_check
        %p3100 = pneg %p3099
      $region50: #{tpu_custom_call.1} parent=5 // pred_check_branch
        %3102 = sbr.rel (%p3100) target = $region52
      $region51: #{tpu_custom_call.1} parent=5 // pred_region
        %s3103 = ssub.s32 %s19, 2
        // Predicated region
        $region53: #{tpu_custom_call.1} parent=51 // pred_check
          %p3104 = pneg %p147
        $region54: #{tpu_custom_call.1} parent=51 // pred_check_branch
          %3106 = sbr.rel (%p3104) target = $region56
        $region55: #{tpu_custom_call.1} parent=51 // pred_region
          %s3107 = sand.u32 %s132, 1
          %s3108 = scalar_lea.sflag [#allocation4], %s3107
          %s3109 = sand.u32 %s132, 1
          %s3110 = smul.addr %s3109, 8
          %s3111 = scalar_lea.vmem [#allocation7], %s3110
          %3112 = dma.done %s3108, 128
        $region56: #{tpu_custom_call.1} parent=51 // pred_fallthru
          _
      $region52: #{tpu_custom_call.1} parent=5 // pred_fallthru
        _
    $region6: #{tpu_custom_call.1} parent=1 // loop_footer
      %s23 = sadd.s32 1, %s19
    $region7: #{tpu_custom_call.1} parent=1 // loop_footer_branch
      %18 = sbr.rel target = $region3
    $region8: #{tpu_custom_call.1} parent=1 // loop_exit
      _
    %3113 = vsyncpa [#allocation3], 1
    %s3114 = scalar_lea.sflag [#allocation3], 1
    %3115 = vsyncpa %s3114, 1
    %3116 = vsyncpa [#allocation6], 1
    %s3117 = scalar_lea.sflag [#allocation6], 1
    %3118 = vsyncpa %s3117, 1
    %3119 = vsyncpa [#allocation4], 1
    %s3120 = scalar_lea.sflag [#allocation4], 1
    %3121 = vsyncpa %s3120, 1

</llo_original>
